<compile_context>
chip_gen: v5e
topology: v5e:2x2
jax: 0.10.0
libtpu: 0.0.40
codegen_flags: <defaults>
</compile_context>

<pallas_src>
import numpy as np
import jax
import jax.numpy as jnp
from jax.experimental import pallas as pl
from jax.experimental.pallas import tpu as pltpu


_VMEM_LIMIT = 48 * 1024 * 1024


def _round_up(x, m):
    return (x + m - 1) // m * m


# ---------------- kernel 1: G1 = relu(A @ XW + b1) @ W2  (block-sparse A) ----------------

def gcn1_kernel(cols_ref, counts_ref, a_ref, xw_ref, w2_ref, b1_ref, g1_ref, acc_ref):
    i = pl.program_id(0)
    k = pl.program_id(1)
    nk = pl.num_programs(1)
    tile = a_ref.shape[0]

    @pl.when(k == 0)
    def _():
        acc_ref[...] = jnp.zeros_like(acc_ref)

    # Only the first counts[i] entries of the column-tile list are real nonzero tiles;
    # padded entries repeat the last valid tile (no new DMA) and are skipped here.
    @pl.when(k < counts_ref[i])
    def _():
        off = pl.multiple_of(cols_ref[i * nk + k] * tile, tile)
        acc_ref[...] += jnp.dot(a_ref[...], xw_ref[pl.ds(off, tile), :],
                                preferred_element_type=jnp.float32)

    @pl.when(k == nk - 1)
    def _():
        h1 = jnp.maximum(acc_ref[...] + b1_ref[...], 0.0)                 # (tile, H) f32
        g1_ref[...] = jnp.dot(h1.astype(jnp.bfloat16), w2_ref[...],
                              preferred_element_type=jnp.float32).astype(g1_ref.dtype)


# -------- kernel 2: H2 = relu(A @ G1 + b2); per-row-block partial mean-pool --------

def gcn2_pool_kernel(cols_ref, counts_ref, a_ref, g1_ref, b2_ref, p_ref, pout_ref, acc_ref):
    i = pl.program_id(0)
    k = pl.program_id(1)
    nk = pl.num_programs(1)
    tile = a_ref.shape[0]

    @pl.when(k == 0)
    def _():
        acc_ref[...] = jnp.zeros_like(acc_ref)

    @pl.when(k < counts_ref[i])
    def _():
        off = pl.multiple_of(cols_ref[i * nk + k] * tile, tile)
        acc_ref[...] += jnp.dot(a_ref[...], g1_ref[pl.ds(off, tile), :],
                                preferred_element_type=jnp.float32)

    @pl.when(k == nk - 1)
    def _():
        h2 = jnp.maximum(acc_ref[...] + b2_ref[...], 0.0)                 # (tile, H) f32
        partial = jnp.dot(p_ref[...], h2.astype(jnp.bfloat16),
                          preferred_element_type=jnp.float32)             # (G, H) f32
        pout_ref[0] = partial


# ------------------------------ pallas_call wrappers ------------------------------

def gcn_conv1_pallas(cols, counts, a_bf, xw_bf, w2_bf, b1, *, tile, nnz_tiles):
    n_pad = a_bf.shape[0]
    h = xw_bf.shape[1]
    r = n_pad // tile
    max_k = cols.shape[0] // r
    flops = 2 * nnz_tiles * tile * tile * h + 2 * n_pad * h * h
    bytes_accessed = (nnz_tiles * tile * tile + 2 * n_pad * h + h * h) * 2 + h * 4
    return pl.pallas_call(
        gcn1_kernel,
        out_shape=jax.ShapeDtypeStruct((n_pad, h), jnp.bfloat16),
        grid_spec=pltpu.PrefetchScalarGridSpec(
            num_scalar_prefetch=2,
            grid=(r, max_k),
            in_specs=[
                # A tile chosen from the prefetched nonzero-column-tile list.
                pl.BlockSpec((tile, tile), lambda i, k, cols, counts: (i, cols[i * max_k + k])),
                pl.BlockSpec((n_pad, h), lambda i, k, cols, counts: (0, 0)),  # XW resident
                pl.BlockSpec((h, h), lambda i, k, cols, counts: (0, 0)),      # W2 resident
                pl.BlockSpec((1, h), lambda i, k, cols, counts: (0, 0)),      # b1 resident
            ],
            out_specs=pl.BlockSpec((tile, h), lambda i, k, cols, counts: (i, 0)),
            scratch_shapes=[pltpu.VMEM((tile, h), jnp.float32)],
        ),
        compiler_params=pltpu.CompilerParams(
            dimension_semantics=("parallel", "arbitrary"),
            vmem_limit_bytes=_VMEM_LIMIT,
        ),
        cost_estimate=pl.CostEstimate(flops=flops, transcendentals=0,
                                      bytes_accessed=bytes_accessed),
    )(cols, counts, a_bf, xw_bf, w2_bf, b1)


def gcn_conv2_pool_pallas(cols, counts, a_bf, g1_bf, b2, pool_bf, *, tile, nnz_tiles):
    n_pad = a_bf.shape[0]
    h = g1_bf.shape[1]
    g = pool_bf.shape[0]
    r = n_pad // tile
    max_k = cols.shape[0] // r
    flops = 2 * nnz_tiles * tile * tile * h + 2 * n_pad * g * h
    bytes_accessed = (nnz_tiles * tile * tile + n_pad * h + g * n_pad) * 2 + (r * g * h + h) * 4
    return pl.pallas_call(
        gcn2_pool_kernel,
        out_shape=jax.ShapeDtypeStruct((r, g, h), jnp.float32),
        grid_spec=pltpu.PrefetchScalarGridSpec(
            num_scalar_prefetch=2,
            grid=(r, max_k),
            in_specs=[
                pl.BlockSpec((tile, tile), lambda i, k, cols, counts: (i, cols[i * max_k + k])),
                pl.BlockSpec((n_pad, h), lambda i, k, cols, counts: (0, 0)),  # G1 resident
                pl.BlockSpec((1, h), lambda i, k, cols, counts: (0, 0)),      # b2 resident
                pl.BlockSpec((g, tile), lambda i, k, cols, counts: (0, i)),   # pool columns
            ],
            out_specs=pl.BlockSpec((1, g, h), lambda i, k, cols, counts: (i, 0, 0)),
            scratch_shapes=[pltpu.VMEM((tile, h), jnp.float32)],
        ),
        compiler_params=pltpu.CompilerParams(
            # no cross-row-block carry anymore -> row axis can shard on v7x megacore
            dimension_semantics=("parallel", "arbitrary"),
            vmem_limit_bytes=_VMEM_LIMIT,
        ),
        cost_estimate=pl.CostEstimate(flops=flops, transcendentals=0,
                                      bytes_accessed=bytes_accessed),
    )(cols, counts, a_bf, g1_bf, b2, pool_bf)


# --------------------------- host-side block-sparsity plan ---------------------------

def _build_tile_plan(a_np, n_pad, tile):
    """Per-row-block list of nonzero A column tiles (padded with the last valid tile)."""
    n = a_np.shape[0]
    r = n_pad // tile
    ap = np.zeros((n_pad, n_pad), np.float32)
    ap[:n, :n] = a_np
    nz = (ap.reshape(r, tile, r, tile) != 0.0).any(axis=(1, 3))   # (r, r) bool
    counts = nz.sum(axis=1).astype(np.int32)                      # (r,)
    max_k = max(int(counts.max()), 1)
    cols = np.zeros((r, max_k), np.int32)
    for i in range(r):
        idx = np.nonzero(nz[i])[0].astype(np.int32)
        if idx.size == 0:
            idx = np.array([i], np.int32)        # arbitrary; count==0 skips the compute
        cols[i, :idx.size] = idx
        cols[i, idx.size:] = idx[-1]             # pad: revisit last tile -> no extra DMA
    nnz_tiles = int(counts.sum())
    return jnp.asarray(cols.reshape(-1)), jnp.asarray(counts), max_k, nnz_tiles


# --------------------------------- full forward ---------------------------------

def front_gnn_pallas(a_norm, x, w1, b1, w2, b2, pool, wfc, bfc, *, tile=256):
    """Full FrontGNN forward. a_norm: (N,N) f32, x: (N,F) f32, pool: (G,N) f32.

    NOTE: builds a host-side block-sparsity plan from the concrete adjacency, so this
    wrapper is not meant to be jitted end-to-end (the Pallas calls themselves are).
    """
    n = a_norm.shape[0]
    n_pad = _round_up(n, tile)
    g = pool.shape[0]

    # Zero padding along the node axis: padded A rows/cols and pool columns are zero,
    # so padded nodes never contribute to any real node or graph.
    a_p = jnp.zeros((n_pad, n_pad), jnp.float32).at[:n, :n].set(a_norm)
    x_p = jnp.zeros((n_pad, x.shape[1]), jnp.float32).at[:n].set(x)
    pool_p = jnp.zeros((g, n_pad), jnp.float32).at[:, :n].set(pool)

    bf = jnp.bfloat16
    a_bf, pool_bf = a_p.astype(bf), pool_p.astype(bf)
    w1_bf, w2_bf, wfc_bf = w1.astype(bf), w2.astype(bf), wfc.astype(bf)

    # Hoisted feature transform: XW = X @ W1 (tiny K=F matmul, done once in XLA).
    xw_bf = jnp.dot(x_p.astype(bf), w1_bf,
                    preferred_element_type=jnp.float32).astype(bf)          # (N_pad, H)

    cols, counts, _, nnz_tiles = _build_tile_plan(np.asarray(a_norm, np.float32), n_pad, tile)

    # Kernel 1: G1 = relu(A @ XW + b1) @ W2   (H1@W2 fused into the epilogue)
    g1 = gcn_conv1_pallas(cols, counts, a_bf, xw_bf, w2_bf, b1,
                          tile=tile, nnz_tiles=nnz_tiles)                    # (N_pad, H) bf16

    # Kernel 2: per-row-block partial pooled sums of relu(A @ G1 + b2)
    pooled_parts = gcn_conv2_pool_pallas(cols, counts, a_bf, g1, b2, pool_bf,
                                         tile=tile, nnz_tiles=nnz_tiles)     # (r, G, H) f32

    # Tiny reduction + fc + ReLU in XLA (keeps the row axis megacore-parallel).
    pooled = pooled_parts.sum(axis=0)                                        # (G, H) f32
    y = jnp.dot(pooled.astype(bf), wfc_bf, preferred_element_type=jnp.float32) + bfc
    return jnp.maximum(y, 0.0)


# ----------------------------- plain-JAX glue & reference -----------------------------

def gcn_normalized_adjacency(edge_index, num_nodes):
    """Dense D^{-1/2} (A + I) D^{-1/2} matching PyG GCNConv(add_self_loops=True)."""
    src, dst = edge_index[0], edge_index[1]
    a = jnp.zeros((num_nodes, num_nodes), jnp.float32)
    a = a.at[dst, src].add(1.0)                      # message flows src -> dst
    a = a + jnp.eye(num_nodes, dtype=jnp.float32)    # self loops
    deg = a.sum(axis=1)
    d_inv_sqrt = jnp.where(deg > 0, 1.0 / jnp.sqrt(deg), 0.0)
    return d_inv_sqrt[:, None] * a * d_inv_sqrt[None, :]


def mean_pool_matrix(batch, num_graphs):
    onehot = (batch[None, :] == jnp.arange(num_graphs)[:, None]).astype(jnp.float32)  # (G, N)
    counts = onehot.sum(axis=1, keepdims=True)
    return onehot / jnp.maximum(counts, 1.0)


def reference_forward(a_norm, x, w1, b1, w2, b2, pool, wfc, bfc):
    """Pure-JAX reference mirroring the kernel's bf16 cast points (f32 accumulation)."""
    bf = jnp.bfloat16
    a_bf, x_bf, pool_bf = a_norm.astype(bf), x.astype(bf), pool.astype(bf)
    w1_bf, w2_bf, wfc_bf = w1.astype(bf), w2.astype(bf), wfc.astype(bf)

    xw1 = jnp.dot(x_bf, w1_bf, preferred_element_type=jnp.float32).astype(bf)
    h1 = jnp.maximum(jnp.dot(a_bf, xw1, preferred_element_type=jnp.float32) + b1, 0.0).astype(bf)
    hw2 = jnp.dot(h1, w2_bf, preferred_element_type=jnp.float32).astype(bf)
    h2 = jnp.maximum(jnp.dot(a_bf, hw2, preferred_element_type=jnp.float32) + b2, 0.0).astype(bf)
    pooled = jnp.dot(pool_bf, h2, preferred_element_type=jnp.float32).astype(bf)
    y = jnp.dot(pooled, wfc_bf, preferred_element_type=jnp.float32) + bfc
    return jnp.maximum(y, 0.0)


if __name__ == "__main__":
    # Shapes consistent with the module (hidden_dim=64, out_dim=128); two ring graphs of
    # 300 nodes -> N_pad=768 at tile=256, so the block-sparse K axis (max 3 tiles/row
    # block, with skipped padded steps) and the K accumulation are actually exercised.
    F = 8             # num_node_features
    H = 64            # hidden_dim
    O = 128           # out_dim
    G = 2             # graphs in the batch
    NODES_PER_GRAPH = 300
    N = G * NODES_PER_GRAPH

    key = jax.random.PRNGKey(0)
    k_x, k_w1, k_b1, k_w2, k_b2, k_wfc = jax.random.split(key, 6)

    x = jax.random.normal(k_x, (N, F), dtype=jnp.float32)

    def ring_edges(offset, n):
        src = jnp.arange(n) + offset
        dst = (jnp.arange(n) + 1) % n + offset
        return jnp.stack([jnp.concatenate([src, dst]),
                          jnp.concatenate([dst, src])], axis=0)

    edge_index = jnp.concatenate(
        [ring_edges(i * NODES_PER_GRAPH, NODES_PER_GRAPH) for i in range(G)], axis=1)
    batch = jnp.concatenate(
        [jnp.full((NODES_PER_GRAPH,), i, jnp.int32) for i in range(G)])

    def glorot(k, shape):
        fan_in, fan_out = shape
        scale = jnp.sqrt(6.0 / (fan_in + fan_out))
        return jax.random.uniform(k, shape, jnp.float32, -scale, scale)

    w1 = glorot(k_w1, (F, H));   b1 = 0.05 * jax.random.normal(k_b1, (1, H), jnp.float32)
    w2 = glorot(k_w2, (H, H));   b2 = 0.05 * jax.random.normal(k_b2, (1, H), jnp.float32)
    wfc = glorot(k_wfc, (H, O)); bfc = jnp.full((1, O), 0.01, jnp.float32)

    a_norm = gcn_normalized_adjacency(edge_index, N)
    pool = mean_pool_matrix(batch, G)

    out = front_gnn_pallas(a_norm, x, w1, b1, w2, b2, pool, wfc, bfc, tile=256)
    out = jax.block_until_ready(out)

    ref = reference_forward(a_norm, x, w1, b1, w2, b2, pool, wfc, bfc)
    assert out.shape == (G, O)
    max_err = jnp.max(jnp.abs(out - ref))
    assert jnp.allclose(out, ref, atol=1e-2, rtol=1e-2), \
        f"Pallas kernel mismatch vs JAX reference (max abs err {max_err})"

    print("KERNEL_OK")
</pallas_src>

<mosaic_0001>
module attributes {stable_mosaic.version = 11 : i64} {
  func.func @gcn1_kernel(%arg0: i32, %arg1: i32, %arg2: memref<9xi32, #tpu.memory_space<smem>>, %arg3: memref<3xi32, #tpu.memory_space<smem>>, %arg4: memref<256x256xbf16, #tpu.memory_space<vmem>>, %arg5: memref<768x64xbf16, #tpu.memory_space<vmem>>, %arg6: memref<64x64xbf16, #tpu.memory_space<vmem>>, %arg7: memref<1x64xf32, #tpu.memory_space<vmem>>, %arg8: memref<256x64xbf16, #tpu.memory_space<vmem>>, %arg9: memref<256x64xf32, #tpu.memory_space<vmem>>) attributes {dimension_semantics = [#tpu.dimension_semantics<parallel>, #tpu.dimension_semantics<arbitrary>], iteration_bounds = array<i64: 3, 3>, scalar_prefetch = 2 : i64, scratch_operands = 1 : i64, tpu.core_type = #tpu.core_type<tc>, window_params = [{transform_indices = @transform_0, window_bounds = array<i64: 256, 256>}, {pipeline_mode = #tpu.pipeline_mode<synchronous>, transform_indices = @transform_1, window_bounds = array<i64: 768, 64>}, {pipeline_mode = #tpu.pipeline_mode<synchronous>, transform_indices = @transform_2, window_bounds = array<i64: 64, 64>}, {pipeline_mode = #tpu.pipeline_mode<synchronous>, transform_indices = @transform_3, window_bounds = array<i64: 1, 64>}, {transform_indices = @transform_4, window_bounds = array<i64: 256, 64>}]} {
    %c0_i32 = arith.constant 0 : i32
    %0 = arith.cmpi eq, %arg1, %c0_i32 : i32
    %1 = arith.extui %0 : i1 to i32
    %c0_i32_0 = arith.constant 0 : i32
    %2 = arith.cmpi ne, %1, %c0_i32_0 : i32
    scf.if %2 {
      %cst = arith.constant 0.000000e+00 : f32
      %11 = vector.broadcast %cst : f32 to vector<256x64xf32>
      %c0 = arith.constant 0 : index
      %c0_3 = arith.constant 0 : index
      %12 = vector.load %arg9[%c0, %c0_3] : memref<256x64xf32, #tpu.memory_space<vmem>>, vector<256x64xf32>
      tpu.vector_store %arg9[%c0, %c0_3], %11 {strides = array<i32>} : memref<256x64xf32, #tpu.memory_space<vmem>>, vector<256x64xf32>,
    } else {
    }
    %3 = arith.index_cast %arg0 : i32 to index
    %4 = memref.load %arg3[%3] : memref<3xi32, #tpu.memory_space<smem>>
    %5 = arith.cmpi slt, %arg1, %4 : i32
    %6 = arith.extui %5 : i1 to i32
    %c0_i32_1 = arith.constant 0 : i32
    %7 = arith.cmpi ne, %6, %c0_i32_1 : i32
    scf.if %7 {
      %c3_i32 = arith.constant 3 : i32
      %11 = arith.muli %arg0, %c3_i32 : i32
      %12 = arith.addi %11, %arg1 : i32
      %13 = arith.index_cast %12 : i32 to index
      %14 = memref.load %arg2[%13] : memref<9xi32, #tpu.memory_space<smem>>
      %c256_i32 = arith.constant 256 : i32
      %15 = arith.muli %14, %c256_i32 : i32
      %16 = tpu.assume_multiple %15, 256 : i32
      %c0 = arith.constant 0 : index
      %c0_3 = arith.constant 0 : index
      %17 = vector.load %arg9[%c0, %c0_3] : memref<256x64xf32, #tpu.memory_space<vmem>>, vector<256x64xf32>
      %c0_4 = arith.constant 0 : index
      %c0_5 = arith.constant 0 : index
      %18 = vector.load %arg4[%c0_4, %c0_5] : memref<256x256xbf16, #tpu.memory_space<vmem>>, vector<256x256xbf16>
      %19 = arith.index_cast %16 : i32 to index
      %c0_6 = arith.constant 0 : index
      %20 = vector.load %arg5[%19, %c0_6] : memref<768x64xbf16, #tpu.memory_space<vmem>>, vector<256x64xbf16>
      %cst = arith.constant dense<0.000000e+00> : vector<256x64xf32>
      %21 = tpu.matmul %18, %20, %cst {dimension_numbers = #tpu.dot_dimension_numbers<[1], [0], [0], [1], [0, 0, 1, 1], [], []>} : vector<256x256xbf16>, vector<256x64xbf16>, vector<256x64xf32> -> vector<256x64xf32>
      %22 = arith.addf %17, %21 : vector<256x64xf32>
      %c0_7 = arith.constant 0 : index
      %c0_8 = arith.constant 0 : index
      %23 = vector.load %arg9[%c0_7, %c0_8] : memref<256x64xf32, #tpu.memory_space<vmem>>, vector<256x64xf32>
      tpu.vector_store %arg9[%c0_7, %c0_8], %22 {strides = array<i32>} : memref<256x64xf32, #tpu.memory_space<vmem>>, vector<256x64xf32>,
    } else {
    }
    %c2_i32 = arith.constant 2 : i32
    %8 = arith.cmpi eq, %arg1, %c2_i32 : i32
    %9 = arith.extui %8 : i1 to i32
    %c0_i32_2 = arith.constant 0 : i32
    %10 = arith.cmpi ne, %9, %c0_i32_2 : i32
    scf.if %10 {
      %c0 = arith.constant 0 : index
      %c0_3 = arith.constant 0 : index
      %11 = vector.load %arg9[%c0, %c0_3] : memref<256x64xf32, #tpu.memory_space<vmem>>, vector<256x64xf32>
      %c0_4 = arith.constant 0 : index
      %c0_5 = arith.constant 0 : index
      %12 = vector.load %arg7[%c0_4, %c0_5] : memref<1x64xf32, #tpu.memory_space<vmem>>, vector<1x64xf32>
      %13 = vector.broadcast %12 : vector<1x64xf32> to vector<256x64xf32>
      %14 = arith.addf %11, %13 : vector<256x64xf32>
      %cst = arith.constant 0.000000e+00 : f32
      %15 = vector.broadcast %cst : f32 to vector<256x64xf32>
      %16 = arith.maximumf %14, %15 : vector<256x64xf32>
      %17 = arith.truncf %16 : vector<256x64xf32> to vector<256x64xbf16>
      %c0_6 = arith.constant 0 : index
      %c0_7 = arith.constant 0 : index
      %18 = vector.load %arg6[%c0_6, %c0_7] : memref<64x64xbf16, #tpu.memory_space<vmem>>, vector<64x64xbf16>
      %cst_8 = arith.constant dense<0.000000e+00> : vector<256x64xf32>
      %19 = tpu.matmul %17, %18, %cst_8 {dimension_numbers = #tpu.dot_dimension_numbers<[1], [0], [0], [1], [0, 0, 1, 1], [], []>} : vector<256x64xbf16>, vector<64x64xbf16>, vector<256x64xf32> -> vector<256x64xf32>
      %20 = arith.truncf %19 : vector<256x64xf32> to vector<256x64xbf16>
      %c0_9 = arith.constant 0 : index
      %c0_10 = arith.constant 0 : index
      %21 = vector.load %arg8[%c0_9, %c0_10] : memref<256x64xbf16, #tpu.memory_space<vmem>>, vector<256x64xbf16>
      tpu.vector_store %arg8[%c0_9, %c0_10], %20 {strides = array<i32>} : memref<256x64xbf16, #tpu.memory_space<vmem>>, vector<256x64xbf16>,
    } else {
    }
    return
  }
  func.func @transform_0(%arg0: i32, %arg1: i32, %arg2: memref<9xi32, #tpu.memory_space<smem>>, %arg3: memref<3xi32, #tpu.memory_space<smem>>) -> (i32, i32) {
    %c3_i32 = arith.constant 3 : i32
    %0 = arith.muli %arg0, %c3_i32 : i32
    %1 = arith.addi %0, %arg1 : i32
    %2 = arith.index_cast %1 : i32 to index
    %3 = memref.load %arg2[%2] : memref<9xi32, #tpu.memory_space<smem>>
    %c0_i32 = arith.constant 0 : i32
    return %arg0, %3 : i32, i32
  }
  func.func @transform_1(%arg0: i32, %arg1: i32, %arg2: memref<9xi32, #tpu.memory_space<smem>>, %arg3: memref<3xi32, #tpu.memory_space<smem>>) -> (i32, i32) {
    %c0_i32 = arith.constant 0 : i32
    %c0_i32_0 = arith.constant 0 : i32
    %c0_i32_1 = arith.constant 0 : i32
    return %c0_i32, %c0_i32_0 : i32, i32
  }
  func.func @transform_2(%arg0: i32, %arg1: i32, %arg2: memref<9xi32, #tpu.memory_space<smem>>, %arg3: memref<3xi32, #tpu.memory_space<smem>>) -> (i32, i32) {
    %c0_i32 = arith.constant 0 : i32
    %c0_i32_0 = arith.constant 0 : i32
    %c0_i32_1 = arith.constant 0 : i32
    return %c0_i32, %c0_i32_0 : i32, i32
  }
  func.func @transform_3(%arg0: i32, %arg1: i32, %arg2: memref<9xi32, #tpu.memory_space<smem>>, %arg3: memref<3xi32, #tpu.memory_space<smem>>) -> (i32, i32) {
    %c0_i32 = arith.constant 0 : i32
    %c0_i32_0 = arith.constant 0 : i32
    %c0_i32_1 = arith.constant 0 : i32
    return %c0_i32, %c0_i32_0 : i32, i32
  }
  func.func @transform_4(%arg0: i32, %arg1: i32, %arg2: memref<9xi32, #tpu.memory_space<smem>>, %arg3: memref<3xi32, #tpu.memory_space<smem>>) -> (i32, i32) {
    %c0_i32 = arith.constant 0 : i32
    %c0_i32_0 = arith.constant 0 : i32
    return %arg0, %c0_i32 : i32, i32
  }
}

</mosaic_0001>

<llo_original>
// kernel: tpu_custom_call.1
$region0: #{tpu_custom_call.1}
  #allocation0 [shape = 'u32[]', space=smem, size = 0x4, offset = 0x4, fixed_abs, tag = 'smem constant byte address 0x4 - core index']
  #allocation1 [shape = 'u32[72,128]{1,0:T(1,128)}', space=vmem, size = 0x9000, scoped, tag = 'internal scratch']
  #allocation2 [shape = 'f32[256,64]{1,0:T(8,128)}', space=vmem, size = 0x20000, scoped, tag = 'scratch operand']
  #allocation3 [shape = 's32[1]{0}', space=sflag, size = 0x4, scoped, tag = 'scoped memory for tpu_custom_call.1']
  #allocation4 [shape = 'u8[512]{0}', space=smem, size = 0x200, scoped, tag = 'prefetched SMEM operand 0']
  #allocation5 [shape = 'u8[512]{0}', space=smem, size = 0x200, scoped, tag = 'prefetched SMEM operand 1']
  %s0 = inlined_call_operand.hbm [shape: s32[9], index: 0, kind: input, shape index: {}]
  %s1 = inlined_call_operand.hbm [shape: s32[3], index: 1, kind: input, shape index: {}]
  %s2 = inlined_call_operand.hbm [shape: bf16[768,768], index: 2, kind: input, shape index: {}]
  %s3 = inlined_call_operand.vmem [shape: bf16[768,64], index: 3, kind: input, shape index: {}]
  %s4 = inlined_call_operand.hbm [shape: bf16[64,64], index: 4, kind: input, shape index: {}]
  %s5 = inlined_call_operand.hbm [shape: f32[1,64], index: 5, kind: input, shape index: {}]
  %s6 = inlined_call_operand.vmem [shape: bf16[768,64], index: 6, kind: output, shape index: {}]
  %s7 = sld [smem:[#allocation0]]
  $region73: #{tpu_custom_call.1} parent=0
    _
  %s9 = ssub.s32 1, %s7
  %s10 = scalar_select 0, %s9, %s7
  %s12 = sshll.u32 %s0, 4
  %s13 = int_to_ptr.hbm [resolvable:$true] %s12
  %15 = dma.hbm_to_smem %s13, 16, [#allocation4], [#allocation3]
  %s17 = sshll.u32 %s1, 4
  %s18 = int_to_ptr.hbm [resolvable:$true] %s17
  %20 = dma.hbm_to_smem %s18, 16, [#allocation5], [#allocation3]
  %22 = dma.done [#allocation3], 32
  %23 = sfence
  $region1: #{tpu_custom_call.1} parent=0
    #allocation6 [shape = 'u8[262144]{0}', space=vmem, size = 0x40000, scoped, tag = 'input window, operand 2']
    #allocation7 [shape = 's32[2]{0}', space=sflag, size = 0x8, scoped, tag = 'scoped memory for tpu_custom_call.1']
    #allocation8 [shape = 'u8[16384]{0}', space=vmem, size = 0x4000, scoped, tag = 'input window, operand 4, single buffered']
    #allocation9 [shape = 's32[1]{0}', space=sflag, size = 0x4, scoped, tag = 'scoped memory for tpu_custom_call.1']
    #allocation10 [shape = 'u8[512]{0}', space=vmem, size = 0x400, scoped, tag = 'input window, operand 5, single buffered']
    %24 = vsyncpa [#allocation7], 0
    %s25 = scalar_lea.sflag [#allocation7], 1
    %26 = vsyncpa %s25, 0
    %27 = vsyncpa [#allocation9], 0
    loop: start=0, step=1, limit=11
    $region2: #{tpu_custom_call.1} parent=1 // loop_pre_header
      _
    $region3: #{tpu_custom_call.1} parent=1 // loop_header
      %s29 = sphi 0, %s33
      %p30 = scmp.ge.s32.totalorder %s29, 11
      %s36 = sphi 0, %s48
      %s37 = sphi 0, %s44
      %s38 = sphi 0, %s36
      %s39 = sphi 0, %s37
      %s40 = sphi 0, %s38
      %s41 = sphi 0, %s39
      %s59 = sphi 0, %s61
      %s62 = sphi 0, %s59
      %s63 = sphi 0, %s62
      %s79 = sphi 0, %s63
      %s83 = sphi 0, %s83
      %s85 = sphi 0, %s83
      %s86 = sphi 0, %s85
      %s100 = sphi 0, %s86
      %s104 = sphi 0, %s104
      %s106 = sphi 0, %s104
      %s107 = sphi 0, %s106
      %s121 = sphi 0, %s107
      %s125 = sphi 0, %s125
      %s127 = sphi 0, %s125
      %s128 = sphi 0, %s127
      %s142 = sphi 0, %s128
      %s148 = sphi 0, %s150
      %s151 = sphi 0, %s148
      %s152 = sphi 0, %s151
      %s168 = sphi 0, %s152
    $region4: #{tpu_custom_call.1} parent=1 // loop_header_branch
      %32 = sbr.rel (%p30) target = $region8
    $region5: #{tpu_custom_call.1} parent=1 // loop_body
      %s34 = ssub.s32 %s29, 1
      %s35 = ssub.s32 %s29, 2
      %s42 = sadd.s32 1, %s37
      %p43 = scmp.ge.s32.totalorder %s42, 3
      %s44 = scalar_select %p43, 0, %s42
      %s45 = sadd.s32 1, %s36
      %s46 = scalar_select %p43, %s45, %s36
      %p47 = scmp.ge.s32.totalorder %s46, 3
      %s48 = scalar_select %p47, 0, %s46
      %s49 = smul.u32 %s36, 3
      %s50 = sadd.s32 %s49, %s37
      %s51 = sld [smem:[#allocation4 + %s50]]
      %s52 = smul.u32 %s48, 3
      %s53 = sadd.s32 %s52, %s44
      %s54 = sld [smem:[#allocation4 + %s53]]
      %s55 = ssub.s32 %s36, %s48
      %s56 = ssub.s32 %s51, %s54
      %s57 = sor.u32 %s55, %s56
      %p58 = scmp.eq.s32.totalorder %s57, 0
      %s60 = sadd.s32 %s59, 1
      %s61 = scalar_select %p58, %s59, %s60
      %p64 = pneg %p58
      %p65 = scmp.eq.s32.totalorder %s29, 8
      %p66 = por %p64, %p65
      %p67 = scmp.ne.s32.totalorder %s59, %s62
      %p68 = scmp.eq.s32.totalorder %s29, 0
      %p69 = por %p67, %p68
      %p70 = scmp.ne.s32.totalorder %s59, %s62
      %p71 = scmp.eq.s32.totalorder %s34, 8
      %p72 = por %p70, %p71
      %p73 = scmp.ne.s32.totalorder %s62, %s63
      %p74 = scmp.eq.s32.totalorder %s34, 0
      %p75 = por %p73, %p74
      %p76 = scmp.ne.s32.totalorder %s62, %s63
      %p77 = scmp.eq.s32.totalorder %s35, 8
      %p78 = por %p76, %p77
      %p80 = scmp.ne.s32.totalorder %s63, %s79
      %p81 = scmp.eq.s32.totalorder %s35, 0
      %p82 = por %p80, %p81
      %s84 = sadd.s32 %s83, 1
      %p87 = scmp.eq.s32.totalorder %s29, 8
      %p88 = scmp.ne.s32.totalorder %s83, %s85
      %p89 = scmp.eq.s32.totalorder %s29, 0
      %p90 = por %p88, %p89
      %p91 = scmp.ne.s32.totalorder %s83, %s85
      %p92 = scmp.eq.s32.totalorder %s34, 8
      %p93 = por %p91, %p92
      %p94 = scmp.ne.s32.totalorder %s85, %s86
      %p95 = scmp.eq.s32.totalorder %s34, 0
      %p96 = por %p94, %p95
      %p97 = scmp.ne.s32.totalorder %s85, %s86
      %p98 = scmp.eq.s32.totalorder %s35, 8
      %p99 = por %p97, %p98
      %p101 = scmp.ne.s32.totalorder %s86, %s100
      %p102 = scmp.eq.s32.totalorder %s35, 0
      %p103 = por %p101, %p102
      %s105 = sadd.s32 %s104, 1
      %p108 = scmp.eq.s32.totalorder %s29, 8
      %p109 = scmp.ne.s32.totalorder %s104, %s106
      %p110 = scmp.eq.s32.totalorder %s29, 0
      %p111 = por %p109, %p110
      %p112 = scmp.ne.s32.totalorder %s104, %s106
      %p113 = scmp.eq.s32.totalorder %s34, 8
      %p114 = por %p112, %p113
      %p115 = scmp.ne.s32.totalorder %s106, %s107
      %p116 = scmp.eq.s32.totalorder %s34, 0
      %p117 = por %p115, %p116
      %p118 = scmp.ne.s32.totalorder %s106, %s107
      %p119 = scmp.eq.s32.totalorder %s35, 8
      %p120 = por %p118, %p119
      %p122 = scmp.ne.s32.totalorder %s107, %s121
      %p123 = scmp.eq.s32.totalorder %s35, 0
      %p124 = por %p122, %p123
      %s126 = sadd.s32 %s125, 1
      %p129 = scmp.eq.s32.totalorder %s29, 8
      %p130 = scmp.ne.s32.totalorder %s125, %s127
      %p131 = scmp.eq.s32.totalorder %s29, 0
      %p132 = por %p130, %p131
      %p133 = scmp.ne.s32.totalorder %s125, %s127
      %p134 = scmp.eq.s32.totalorder %s34, 8
      %p135 = por %p133, %p134
      %p136 = scmp.ne.s32.totalorder %s127, %s128
      %p137 = scmp.eq.s32.totalorder %s34, 0
      %p138 = por %p136, %p137
      %p139 = scmp.ne.s32.totalorder %s127, %s128
      %p140 = scmp.eq.s32.totalorder %s35, 8
      %p141 = por %p139, %p140
      %p143 = scmp.ne.s32.totalorder %s128, %s142
      %p144 = scmp.eq.s32.totalorder %s35, 0
      %p145 = por %p143, %p144
      %s146 = ssub.s32 %s36, %s48
      %p147 = scmp.eq.s32.totalorder %s146, 0
      %s149 = sadd.s32 %s148, 1
      %s150 = scalar_select %p147, %s148, %s149
      %p153 = pneg %p147
      %p154 = scmp.eq.s32.totalorder %s29, 8
      %p155 = por %p153, %p154
      %p156 = scmp.ne.s32.totalorder %s148, %s151
      %p157 = scmp.eq.s32.totalorder %s29, 0
      %p158 = por %p156, %p157
      %p159 = scmp.ne.s32.totalorder %s148, %s151
      %p160 = scmp.eq.s32.totalorder %s34, 8
      %p161 = por %p159, %p160
      %p162 = scmp.ne.s32.totalorder %s151, %s152
      %p163 = scmp.eq.s32.totalorder %s34, 0
      %p164 = por %p162, %p163
      %p165 = scmp.ne.s32.totalorder %s151, %s152
      %p166 = scmp.eq.s32.totalorder %s35, 8
      %p167 = por %p165, %p166
      %p169 = scmp.ne.s32.totalorder %s152, %s168
      %p170 = scmp.eq.s32.totalorder %s35, 0
      %p171 = por %p169, %p170
      %p172 = scmp.le.s32.totalorder 1, %s29
      %p173 = scmp.lt.s32.totalorder %s29, 10
      %p174 = pnand %p172, %p173
      %p175 = pneg %p174
      // Predicated region
      $region9: #{tpu_custom_call.1} parent=5 // pred_check
        _
      $region10: #{tpu_custom_call.1} parent=5 // pred_check_branch
        %177 = sbr.rel (%p174) target = $region12
      $region11: #{tpu_custom_call.1} parent=5 // pred_region
        %s178 = ssub.s32 %s29, 1
        // Predicated region
        $region13: #{tpu_custom_call.1} parent=11 // pred_check
          %p179 = pneg %p96
        $region14: #{tpu_custom_call.1} parent=11 // pred_check_branch
          %181 = sbr.rel (%p179) target = $region16
        $region15: #{tpu_custom_call.1} parent=11 // pred_region
          _
        $region16: #{tpu_custom_call.1} parent=11 // pred_fallthru
          _
        // Predicated region
        $region17: #{tpu_custom_call.1} parent=11 // pred_check
          %p182 = pneg %p117
        $region18: #{tpu_custom_call.1} parent=11 // pred_check_branch
          %184 = sbr.rel (%p182) target = $region20
        $region19: #{tpu_custom_call.1} parent=11 // pred_region
          %186 = vsyncadd [#allocation9], 0
          %s187 = sshll.u32 %s4, 4
          %s188 = int_to_ptr.hbm [resolvable:$true] %s187
          %s189 = sshll.u32 [#allocation8], 4
          %s190 = int_to_ptr.vmem [resolvable:$true] %s189
          %195 = dma.hbm_to_vmem [thread:$0]  %s188, 512, %s190, [#allocation9], 64, 64, 4
        $region20: #{tpu_custom_call.1} parent=11 // pred_fallthru
          _
        // Predicated region
        $region21: #{tpu_custom_call.1} parent=11 // pred_check
          %p196 = pneg %p138
        $region22: #{tpu_custom_call.1} parent=11 // pred_check_branch
          %198 = sbr.rel (%p196) target = $region24
        $region23: #{tpu_custom_call.1} parent=11 // pred_region
          %200 = vsyncadd [#allocation9], 0
          %s202 = sshll.u32 %s5, 4
          %s203 = int_to_ptr.hbm [resolvable:$true] %s202
          %s204 = sshll.u32 [#allocation10], 4
          %s205 = int_to_ptr.vmem [resolvable:$true] %s204
          %207 = dma.hbm_to_vmem [thread:$0]  %s203, 16, %s205, [#allocation9]
        $region24: #{tpu_custom_call.1} parent=11 // pred_fallthru
          _
      $region12: #{tpu_custom_call.1} parent=5 // pred_fallthru
        _
      %p208 = scmp.lt.s32.totalorder %s29, 9
      // Predicated region
      $region25: #{tpu_custom_call.1} parent=5 // pred_check
        %p209 = pneg %p208
      $region26: #{tpu_custom_call.1} parent=5 // pred_check_branch
        %211 = sbr.rel (%p209) target = $region28
      $region27: #{tpu_custom_call.1} parent=5 // pred_region
        // Predicated region
        $region29: #{tpu_custom_call.1} parent=27 // pred_check
          %p212 = pneg %p69
        $region30: #{tpu_custom_call.1} parent=27 // pred_check_branch
          %214 = sbr.rel (%p212) target = $region32
        $region31: #{tpu_custom_call.1} parent=27 // pred_region
          %s215 = sand.u32 %s59, 1
          %s216 = scalar_lea.sflag [#allocation7], %s215
          %s217 = sand.u32 %s59, 1
          %s218 = smul.addr %s217, 256
          %s219 = scalar_lea.vmem [#allocation6], %s218
          %s220 = smul.u32 %s36, 3
          %s221 = sadd.s32 %s220, %s37
          %s222 = sld [smem:[#allocation4 + %s221]]
          %s223 = smul.u32 32, %s36
          %s224 = smul.u32 2, %s222
          %226 = vsyncadd %s216, 0
          %s227 = smul.addr %s223, 6
          %s228 = sadd.s32 %s224, %s227
          %s229 = smul.addr %s228, 4
          %s230 = scalar_lea.hbm %s2, %s229
          %s231 = sshll.u32 %s230, 4
          %s232 = int_to_ptr.hbm [resolvable:$true] %s231
          %s233 = sshll.u32 %s219, 4
          %s234 = int_to_ptr.vmem [resolvable:$true] %s233
          %239 = dma.hbm_to_vmem [thread:$0]  %s232, 4096, %s234, %s216, 384, 128, 8
        $region32: #{tpu_custom_call.1} parent=27 // pred_fallthru
          _
      $region28: #{tpu_custom_call.1} parent=5 // pred_fallthru
        _
      %p240 = scmp.le.s32.totalorder 1, %s29
      %p241 = scmp.lt.s32.totalorder %s29, 10
      %p242 = pnand %p240, %p241
      %p243 = pneg %p242
      // Predicated region
      $region33: #{tpu_custom_call.1} parent=5 // pred_check
        _
      $region34: #{tpu_custom_call.1} parent=5 // pred_check_branch
        %245 = sbr.rel (%p242) target = $region36
      $region35: #{tpu_custom_call.1} parent=5 // pred_region
        %s246 = ssub.s32 %s29, 1
        %s247 = sand.u32 %s62, 1
        %s248 = scalar_lea.sflag [#allocation7], %s247
        %s249 = sand.u32 %s62, 1
        %s250 = smul.addr %s249, 256
        %s251 = scalar_lea.vmem [#allocation6], %s250
        // Predicated region
        $region37: #{tpu_custom_call.1} parent=35 // pred_check
          %p252 = pneg %p75
        $region38: #{tpu_custom_call.1} parent=35 // pred_check_branch
          %254 = sbr.rel (%p252) target = $region40
        $region39: #{tpu_custom_call.1} parent=35 // pred_region
          %256 = dma.done %s248, 4096
        $region40: #{tpu_custom_call.1} parent=35 // pred_fallthru
          _
        // Predicated region
        $region41: #{tpu_custom_call.1} parent=35 // pred_check
          %p257 = pneg %p117
        $region42: #{tpu_custom_call.1} parent=35 // pred_check_branch
          %259 = sbr.rel (%p257) target = $region44
        $region43: #{tpu_custom_call.1} parent=35 // pred_region
          %261 = dma.done [#allocation9], 512
        $region44: #{tpu_custom_call.1} parent=35 // pred_fallthru
          _
        // Predicated region
        $region45: #{tpu_custom_call.1} parent=35 // pred_check
          %p262 = pneg %p138
        $region46: #{tpu_custom_call.1} parent=35 // pred_check_branch
          %264 = sbr.rel (%p262) target = $region48
        $region47: #{tpu_custom_call.1} parent=35 // pred_region
          %266 = dma.done [#allocation9], 16
        $region48: #{tpu_custom_call.1} parent=35 // pred_fallthru
          _
        %s267 = sand.u32 %s62, 1
        %s268 = scalar_lea.sflag [#allocation7], %s267
        %s269 = sand.u32 %s62, 1
        %s270 = smul.addr %s269, 256
        %s271 = scalar_lea.vmem [#allocation6], %s270
        %p272 = pneg %p75
        %p273 = pneg %p72
        %p274 = pneg %p96
        %p275 = pneg %p93
        %p276 = pneg %p117
        %p277 = pneg %p114
        %p278 = pneg %p138
        %p279 = pneg %p135
        %p280 = pneg %p164
        %p281 = pneg %p161
        %s282 = smul.u32 32, %s38
        %p283 = scmp.lt.s32.totalorder %s282, 95
        %s284 = scalar_select %p283, %s282, 95
        %s285 = smul.addr %s284, 4
        %s286 = scalar_lea.vmem %s6, %s285
        %s287 = smul.u32 %s38, 3
        %s288 = sadd.s32 %s287, %s39
        %s289 = sld [smem:[#allocation4 + %s288]]
        %s290 = smul.u32 32, %s38
        %s291 = smul.u32 2, %s289
        %s292 = smul.u32 32, %s38
        %p293 = scmp.lt.s32.totalorder %s292, 95
        %s294 = scalar_select %p293, %s292, 95
        %s295 = smul.addr %s294, 4
        %s296 = scalar_lea.vmem %s6, %s295
        %s297 = smul.u32 32, %s38
        %p299 = scmp.eq.s32.totalorder %s39, 0
        // Predicated region
        $region49: #{tpu_custom_call.1} parent=35 // pred_check
          %p300 = pneg %p299
        $region50: #{tpu_custom_call.1} parent=35 // pred_check_branch
          %302 = sbr.rel (%p300) target = $region52
        $region51: #{tpu_custom_call.1} parent=35 // pred_region
          %vm303 = vcmask 523264
          %304 = vst.msk [vmem:[#allocation2] sm:$0xff] %vm303, 0.0
          %305 = vst.msk [vmem:[#allocation2 + $0x8] sm:$0xff] %vm303, 0.0
          %306 = vst.msk [vmem:[#allocation2 + $0x10] sm:$0xff] %vm303, 0.0
          %307 = vst.msk [vmem:[#allocation2 + $0x18] sm:$0xff] %vm303, 0.0
          %308 = vst.msk [vmem:[#allocation2 + $0x20] sm:$0xff] %vm303, 0.0
          %309 = vst.msk [vmem:[#allocation2 + $0x28] sm:$0xff] %vm303, 0.0
          %310 = vst.msk [vmem:[#allocation2 + $0x30] sm:$0xff] %vm303, 0.0
          %311 = vst.msk [vmem:[#allocation2 + $0x38] sm:$0xff] %vm303, 0.0
          %312 = vst.msk [vmem:[#allocation2 + $0x40] sm:$0xff] %vm303, 0.0
          %313 = vst.msk [vmem:[#allocation2 + $0x48] sm:$0xff] %vm303, 0.0
          %314 = vst.msk [vmem:[#allocation2 + $0x50] sm:$0xff] %vm303, 0.0
          %315 = vst.msk [vmem:[#allocation2 + $0x58] sm:$0xff] %vm303, 0.0
          %316 = vst.msk [vmem:[#allocation2 + $0x60] sm:$0xff] %vm303, 0.0
          %317 = vst.msk [vmem:[#allocation2 + $0x68] sm:$0xff] %vm303, 0.0
          %318 = vst.msk [vmem:[#allocation2 + $0x70] sm:$0xff] %vm303, 0.0
          %319 = vst.msk [vmem:[#allocation2 + $0x78] sm:$0xff] %vm303, 0.0
          %320 = vst.msk [vmem:[#allocation2 + $0x80] sm:$0xff] %vm303, 0.0
          %321 = vst.msk [vmem:[#allocation2 + $0x88] sm:$0xff] %vm303, 0.0
          %322 = vst.msk [vmem:[#allocation2 + $0x90] sm:$0xff] %vm303, 0.0
          %323 = vst.msk [vmem:[#allocation2 + $0x98] sm:$0xff] %vm303, 0.0
          %324 = vst.msk [vmem:[#allocation2 + $0xa0] sm:$0xff] %vm303, 0.0
          %325 = vst.msk [vmem:[#allocation2 + $0xa8] sm:$0xff] %vm303, 0.0
          %326 = vst.msk [vmem:[#allocation2 + $0xb0] sm:$0xff] %vm303, 0.0
          %327 = vst.msk [vmem:[#allocation2 + $0xb8] sm:$0xff] %vm303, 0.0
          %328 = vst.msk [vmem:[#allocation2 + $0xc0] sm:$0xff] %vm303, 0.0
          %329 = vst.msk [vmem:[#allocation2 + $0xc8] sm:$0xff] %vm303, 0.0
          %330 = vst.msk [vmem:[#allocation2 + $0xd0] sm:$0xff] %vm303, 0.0
          %331 = vst.msk [vmem:[#allocation2 + $0xd8] sm:$0xff] %vm303, 0.0
          %332 = vst.msk [vmem:[#allocation2 + $0xe0] sm:$0xff] %vm303, 0.0
          %333 = vst.msk [vmem:[#allocation2 + $0xe8] sm:$0xff] %vm303, 0.0
          %334 = vst.msk [vmem:[#allocation2 + $0xf0] sm:$0xff] %vm303, 0.0
          %335 = vst.msk [vmem:[#allocation2 + $0xf8] sm:$0xff] %vm303, 0.0
        $region52: #{tpu_custom_call.1} parent=35 // pred_fallthru
          _
        %s336 = sld [smem:[#allocation5 + %s38]]
        %p337 = scmp.lt.s32.totalorder %s39, %s336
        // Predicated region
        $region53: #{tpu_custom_call.1} parent=35 // pred_check
          %p338 = pneg %p337
        $region54: #{tpu_custom_call.1} parent=35 // pred_check_branch
          %340 = sbr.rel (%p338) target = $region56
        $region55: #{tpu_custom_call.1} parent=35 // pred_region
          %s341 = smul.u32 %s38, 3
          %s342 = sadd.s32 %s341, %s39
          %s343 = sld [smem:[#allocation4 + %s342]]
          %s344 = smul.u32 %s343, 256
          %v345 = vld [vmem:[#allocation2] sm:$0xff]
          %v346 = vld [vmem:[#allocation2 + $0x8] sm:$0xff]
          %v347 = vld [vmem:[#allocation2 + $0x10] sm:$0xff]
          %v348 = vld [vmem:[#allocation2 + $0x18] sm:$0xff]
          %v349 = vld [vmem:[#allocation2 + $0x20] sm:$0xff]
          %v350 = vld [vmem:[#allocation2 + $0x28] sm:$0xff]
          %v351 = vld [vmem:[#allocation2 + $0x30] sm:$0xff]
          %v352 = vld [vmem:[#allocation2 + $0x38] sm:$0xff]
          %v353 = vld [vmem:[#allocation2 + $0x40] sm:$0xff]
          %v354 = vld [vmem:[#allocation2 + $0x48] sm:$0xff]
          %v355 = vld [vmem:[#allocation2 + $0x50] sm:$0xff]
          %v356 = vld [vmem:[#allocation2 + $0x58] sm:$0xff]
          %v357 = vld [vmem:[#allocation2 + $0x60] sm:$0xff]
          %v358 = vld [vmem:[#allocation2 + $0x68] sm:$0xff]
          %v359 = vld [vmem:[#allocation2 + $0x70] sm:$0xff]
          %v360 = vld [vmem:[#allocation2 + $0x78] sm:$0xff]
          %v361 = vld [vmem:[#allocation2 + $0x80] sm:$0xff]
          %v362 = vld [vmem:[#allocation2 + $0x88] sm:$0xff]
          %v363 = vld [vmem:[#allocation2 + $0x90] sm:$0xff]
          %v364 = vld [vmem:[#allocation2 + $0x98] sm:$0xff]
          %v365 = vld [vmem:[#allocation2 + $0xa0] sm:$0xff]
          %v366 = vld [vmem:[#allocation2 + $0xa8] sm:$0xff]
          %v367 = vld [vmem:[#allocation2 + $0xb0] sm:$0xff]
          %v368 = vld [vmem:[#allocation2 + $0xb8] sm:$0xff]
          %v369 = vld [vmem:[#allocation2 + $0xc0] sm:$0xff]
          %v370 = vld [vmem:[#allocation2 + $0xc8] sm:$0xff]
          %v371 = vld [vmem:[#allocation2 + $0xd0] sm:$0xff]
          %v372 = vld [vmem:[#allocation2 + $0xd8] sm:$0xff]
          %v373 = vld [vmem:[#allocation2 + $0xe0] sm:$0xff]
          %v374 = vld [vmem:[#allocation2 + $0xe8] sm:$0xff]
          %v375 = vld [vmem:[#allocation2 + $0xf0] sm:$0xff]
          %v376 = vld [vmem:[#allocation2 + $0xf8] sm:$0xff]
          %v377 = vld [vmem:[%s251] sm:$0xff]
          %v378 = vld [vmem:[%s251 + $0x8] sm:$0xff]
          %v379 = vld [vmem:[%s251 + $0x10] sm:$0xff]
          %v380 = vld [vmem:[%s251 + $0x18] sm:$0xff]
          %v381 = vld [vmem:[%s251 + $0x20] sm:$0xff]
          %v382 = vld [vmem:[%s251 + $0x28] sm:$0xff]
          %v383 = vld [vmem:[%s251 + $0x30] sm:$0xff]
          %v384 = vld [vmem:[%s251 + $0x38] sm:$0xff]
          %v385 = vld [vmem:[%s251 + $0x40] sm:$0xff]
          %v386 = vld [vmem:[%s251 + $0x48] sm:$0xff]
          %v387 = vld [vmem:[%s251 + $0x50] sm:$0xff]
          %v388 = vld [vmem:[%s251 + $0x58] sm:$0xff]
          %v389 = vld [vmem:[%s251 + $0x60] sm:$0xff]
          %v390 = vld [vmem:[%s251 + $0x68] sm:$0xff]
          %v391 = vld [vmem:[%s251 + $0x70] sm:$0xff]
          %v392 = vld [vmem:[%s251 + $0x78] sm:$0xff]
          %v393 = vld [vmem:[%s251 + $0x80] sm:$0xff]
          %v394 = vld [vmem:[%s251 + $0x88] sm:$0xff]
          %v395 = vld [vmem:[%s251 + $0x90] sm:$0xff]
          %v396 = vld [vmem:[%s251 + $0x98] sm:$0xff]
          %v397 = vld [vmem:[%s251 + $0xa0] sm:$0xff]
          %v398 = vld [vmem:[%s251 + $0xa8] sm:$0xff]
          %v399 = vld [vmem:[%s251 + $0xb0] sm:$0xff]
          %v400 = vld [vmem:[%s251 + $0xb8] sm:$0xff]
          %v401 = vld [vmem:[%s251 + $0xc0] sm:$0xff]
          %v402 = vld [vmem:[%s251 + $0xc8] sm:$0xff]
          %v403 = vld [vmem:[%s251 + $0xd0] sm:$0xff]
          %v404 = vld [vmem:[%s251 + $0xd8] sm:$0xff]
          %v405 = vld [vmem:[%s251 + $0xe0] sm:$0xff]
          %v406 = vld [vmem:[%s251 + $0xe8] sm:$0xff]
          %v407 = vld [vmem:[%s251 + $0xf0] sm:$0xff]
          %v408 = vld [vmem:[%s251 + $0xf8] sm:$0xff]
          %s409 = sshra.s32 %s344, 3
          %s410 = sand.u32 %s344, 7
          %s411 = smul.addr %s409, 4
          %s412 = scalar_lea.vmem %s3, %s411
          %v413 = vld [vmem:[%s412] sm:$0xf]
          %v414 = vld [vmem:[%s412 + $0x4] sm:$0xf]
          %v415 = vld [vmem:[%s412 + $0x8] sm:$0xf]
          %v416 = vld [vmem:[%s412 + $0xc] sm:$0xf]
          %v417 = vld [vmem:[%s412 + $0x10] sm:$0xf]
          %v418 = vld [vmem:[%s412 + $0x14] sm:$0xf]
          %v419 = vld [vmem:[%s412 + $0x18] sm:$0xf]
          %v420 = vld [vmem:[%s412 + $0x1c] sm:$0xf]
          %v421 = vld [vmem:[%s412 + $0x20] sm:$0xf]
          %v422 = vld [vmem:[%s412 + $0x24] sm:$0xf]
          %v423 = vld [vmem:[%s412 + $0x28] sm:$0xf]
          %v424 = vld [vmem:[%s412 + $0x2c] sm:$0xf]
          %v425 = vld [vmem:[%s412 + $0x30] sm:$0xf]
          %v426 = vld [vmem:[%s412 + $0x34] sm:$0xf]
          %v427 = vld [vmem:[%s412 + $0x38] sm:$0xf]
          %v428 = vld [vmem:[%s412 + $0x3c] sm:$0xf]
          %v429 = vld [vmem:[%s412 + $0x40] sm:$0xf]
          %v430 = vld [vmem:[%s412 + $0x44] sm:$0xf]
          %v431 = vld [vmem:[%s412 + $0x48] sm:$0xf]
          %v432 = vld [vmem:[%s412 + $0x4c] sm:$0xf]
          %v433 = vld [vmem:[%s412 + $0x50] sm:$0xf]
          %v434 = vld [vmem:[%s412 + $0x54] sm:$0xf]
          %v435 = vld [vmem:[%s412 + $0x58] sm:$0xf]
          %v436 = vld [vmem:[%s412 + $0x5c] sm:$0xf]
          %v437 = vld [vmem:[%s412 + $0x60] sm:$0xf]
          %v438 = vld [vmem:[%s412 + $0x64] sm:$0xf]
          %v439 = vld [vmem:[%s412 + $0x68] sm:$0xf]
          %v440 = vld [vmem:[%s412 + $0x6c] sm:$0xf]
          %v441 = vld [vmem:[%s412 + $0x70] sm:$0xf]
          %v442 = vld [vmem:[%s412 + $0x74] sm:$0xf]
          %v443 = vld [vmem:[%s412 + $0x78] sm:$0xf]
          %v444 = vld [vmem:[%s412 + $0x7c] sm:$0xf]
          %v477 = vunpack.c.l.b16 %v377
          %v478 = vunpack.c.h.b16 %v377
          %v479 = vunpack.c.l.b16 %v378
          %v480 = vunpack.c.h.b16 %v378
          %v481 = vunpack.c.l.b16 %v379
          %v482 = vunpack.c.h.b16 %v379
          %v483 = vunpack.c.l.b16 %v380
          %v484 = vunpack.c.h.b16 %v380
          %v485 = vunpack.c.l.b16 %v381
          %v486 = vunpack.c.h.b16 %v381
          %v487 = vunpack.c.l.b16 %v382
          %v488 = vunpack.c.h.b16 %v382
          %v489 = vunpack.c.l.b16 %v383
          %v490 = vunpack.c.h.b16 %v383
          %v491 = vunpack.c.l.b16 %v384
          %v492 = vunpack.c.h.b16 %v384
          %v493 = vunpack.c.l.b16 %v385
          %v494 = vunpack.c.h.b16 %v385
          %v495 = vunpack.c.l.b16 %v386
          %v496 = vunpack.c.h.b16 %v386
          %v497 = vunpack.c.l.b16 %v387
          %v498 = vunpack.c.h.b16 %v387
          %v499 = vunpack.c.l.b16 %v388
          %v500 = vunpack.c.h.b16 %v388
          %v501 = vunpack.c.l.b16 %v389
          %v502 = vunpack.c.h.b16 %v389
          %v503 = vunpack.c.l.b16 %v390
          %v504 = vunpack.c.h.b16 %v390
          %v505 = vunpack.c.l.b16 %v391
          %v506 = vunpack.c.h.b16 %v391
          %v507 = vunpack.c.l.b16 %v392
          %v508 = vunpack.c.h.b16 %v392
          %v509 = vunpack.c.l.b16 %v393
          %v510 = vunpack.c.h.b16 %v393
          %v511 = vunpack.c.l.b16 %v394
          %v512 = vunpack.c.h.b16 %v394
          %v513 = vunpack.c.l.b16 %v395
          %v514 = vunpack.c.h.b16 %v395
          %v515 = vunpack.c.l.b16 %v396
          %v516 = vunpack.c.h.b16 %v396
          %v517 = vunpack.c.l.b16 %v397
          %v518 = vunpack.c.h.b16 %v397
          %v519 = vunpack.c.l.b16 %v398
          %v520 = vunpack.c.h.b16 %v398
          %v521 = vunpack.c.l.b16 %v399
          %v522 = vunpack.c.h.b16 %v399
          %v523 = vunpack.c.l.b16 %v400
          %v524 = vunpack.c.h.b16 %v400
          %v525 = vunpack.c.l.b16 %v401
          %v526 = vunpack.c.h.b16 %v401
          %v527 = vunpack.c.l.b16 %v402
          %v528 = vunpack.c.h.b16 %v402
          %v529 = vunpack.c.l.b16 %v403
          %v530 = vunpack.c.h.b16 %v403
          %v531 = vunpack.c.l.b16 %v404
          %v532 = vunpack.c.h.b16 %v404
          %v533 = vunpack.c.l.b16 %v405
          %v534 = vunpack.c.h.b16 %v405
          %v535 = vunpack.c.l.b16 %v406
          %v536 = vunpack.c.h.b16 %v406
          %v537 = vunpack.c.l.b16 %v407
          %v538 = vunpack.c.h.b16 %v407
          %v539 = vunpack.c.l.b16 %v408
          %v540 = vunpack.c.h.b16 %v408
          %v541 = vpack.c.b16 %v479, %v477
          %v542 = vpack.c.b16 %v480, %v478
          %v543 = vpack.c.b16 %v483, %v481
          %v544 = vpack.c.b16 %v484, %v482
          %v545 = vpack.c.b16 %v487, %v485
          %v546 = vpack.c.b16 %v488, %v486
          %v547 = vpack.c.b16 %v491, %v489
          %v548 = vpack.c.b16 %v492, %v490
          %v549 = vpack.c.b16 %v495, %v493
          %v550 = vpack.c.b16 %v496, %v494
          %v551 = vpack.c.b16 %v499, %v497
          %v552 = vpack.c.b16 %v500, %v498
          %v553 = vpack.c.b16 %v503, %v501
          %v554 = vpack.c.b16 %v504, %v502
          %v555 = vpack.c.b16 %v507, %v505
          %v556 = vpack.c.b16 %v508, %v506
          %v557 = vpack.c.b16 %v511, %v509
          %v558 = vpack.c.b16 %v512, %v510
          %v559 = vpack.c.b16 %v515, %v513
          %v560 = vpack.c.b16 %v516, %v514
          %v561 = vpack.c.b16 %v519, %v517
          %v562 = vpack.c.b16 %v520, %v518
          %v563 = vpack.c.b16 %v523, %v521
          %v564 = vpack.c.b16 %v524, %v522
          %v565 = vpack.c.b16 %v527, %v525
          %v566 = vpack.c.b16 %v528, %v526
          %v567 = vpack.c.b16 %v531, %v529
          %v568 = vpack.c.b16 %v532, %v530
          %v569 = vpack.c.b16 %v535, %v533
          %v570 = vpack.c.b16 %v536, %v534
          %v571 = vpack.c.b16 %v539, %v537
          %v572 = vpack.c.b16 %v540, %v538
          %v637 = vunpack.c.l.b16 %v413
          %v638 = vunpack.c.l.b16 %v414
          %v639 = vunpack.c.l.b16 %v415
          %v640 = vunpack.c.l.b16 %v416
          %v641 = vunpack.c.l.b16 %v417
          %v642 = vunpack.c.l.b16 %v418
          %v643 = vunpack.c.l.b16 %v419
          %v644 = vunpack.c.l.b16 %v420
          %v645 = vunpack.c.l.b16 %v421
          %v646 = vunpack.c.l.b16 %v422
          %v647 = vunpack.c.l.b16 %v423
          %v648 = vunpack.c.l.b16 %v424
          %v649 = vunpack.c.l.b16 %v425
          %v650 = vunpack.c.l.b16 %v426
          %v651 = vunpack.c.l.b16 %v427
          %v652 = vunpack.c.l.b16 %v428
          %v653 = vunpack.c.l.b16 %v429
          %v654 = vunpack.c.l.b16 %v430
          %v655 = vunpack.c.l.b16 %v431
          %v656 = vunpack.c.l.b16 %v432
          %v657 = vunpack.c.l.b16 %v433
          %v658 = vunpack.c.l.b16 %v434
          %v659 = vunpack.c.l.b16 %v435
          %v660 = vunpack.c.l.b16 %v436
          %v661 = vunpack.c.l.b16 %v437
          %v662 = vunpack.c.l.b16 %v438
          %v663 = vunpack.c.l.b16 %v439
          %v664 = vunpack.c.l.b16 %v440
          %v665 = vunpack.c.l.b16 %v441
          %v666 = vunpack.c.l.b16 %v442
          %v667 = vunpack.c.l.b16 %v443
          %v668 = vunpack.c.l.b16 %v444
          %v669 = vpack.c.b16 %v638, %v637
          %v670 = vpack.c.b16 %v640, %v639
          %v671 = vpack.c.b16 %v642, %v641
          %v672 = vpack.c.b16 %v644, %v643
          %v673 = vpack.c.b16 %v646, %v645
          %v674 = vpack.c.b16 %v648, %v647
          %v675 = vpack.c.b16 %v650, %v649
          %v676 = vpack.c.b16 %v652, %v651
          %v677 = vpack.c.b16 %v654, %v653
          %v678 = vpack.c.b16 %v656, %v655
          %v679 = vpack.c.b16 %v658, %v657
          %v680 = vpack.c.b16 %v660, %v659
          %v681 = vpack.c.b16 %v662, %v661
          %v682 = vpack.c.b16 %v664, %v663
          %v683 = vpack.c.b16 %v666, %v665
          %v684 = vpack.c.b16 %v668, %v667
          %701 = vmatpush.bf16.msra.mxu0 %v676
          %702 = vmatpush.bf16.msra.mxu0 %v675
          %703 = vmatpush.bf16.msra.mxu0 %v674
          %704 = vmatpush.bf16.msra.mxu0 %v673
          %705 = vmatpush.bf16.msra.mxu0 %v672
          %706 = vmatpush.bf16.msra.mxu0 %v671
          %707 = vmatpush.bf16.msra.mxu0 %v670
          %708 = vmatpush.bf16.msra.mxu0 %v669
          %709 = vmatmul.bf16.gmra.mxu0 %v541
          %v710 = vpop.f32.mrf.mxu0
          %v711 = vadd.f32 0.0, %v710
          %v712 = vpop.f32.mrf.mxu0
          %v713 = vadd.f32 0.0, %v712
          %714 = vmatmul.bf16.gmra.mxu0 %v543
          %v715 = vpop.f32.mrf.mxu0
          %v716 = vadd.f32 0.0, %v715
          %v717 = vpop.f32.mrf.mxu0
          %v718 = vadd.f32 0.0, %v717
          %719 = vmatmul.bf16.gmra.mxu0 %v545
          %v720 = vpop.f32.mrf.mxu0
          %v721 = vadd.f32 0.0, %v720
          %v722 = vpop.f32.mrf.mxu0
          %v723 = vadd.f32 0.0, %v722
          %724 = vmatmul.bf16.gmra.mxu0 %v547
          %v725 = vpop.f32.mrf.mxu0
          %v726 = vadd.f32 0.0, %v725
          %v727 = vpop.f32.mrf.mxu0
          %v728 = vadd.f32 0.0, %v727
          %729 = vmatmul.bf16.gmra.mxu0 %v549
          %v730 = vpop.f32.mrf.mxu0
          %v731 = vadd.f32 0.0, %v730
          %v732 = vpop.f32.mrf.mxu0
          %v733 = vadd.f32 0.0, %v732
          %734 = vmatmul.bf16.gmra.mxu0 %v551
          %v735 = vpop.f32.mrf.mxu0
          %v736 = vadd.f32 0.0, %v735
          %v737 = vpop.f32.mrf.mxu0
          %v738 = vadd.f32 0.0, %v737
          %739 = vmatmul.bf16.gmra.mxu0 %v553
          %v740 = vpop.f32.mrf.mxu0
          %v741 = vadd.f32 0.0, %v740
          %v742 = vpop.f32.mrf.mxu0
          %v743 = vadd.f32 0.0, %v742
          %744 = vmatmul.bf16.gmra.mxu0 %v555
          %v745 = vpop.f32.mrf.mxu0
          %v746 = vadd.f32 0.0, %v745
          %v747 = vpop.f32.mrf.mxu0
          %v748 = vadd.f32 0.0, %v747
          %749 = vmatmul.bf16.gmra.mxu0 %v557
          %v750 = vpop.f32.mrf.mxu0
          %v751 = vadd.f32 0.0, %v750
          %v752 = vpop.f32.mrf.mxu0
          %v753 = vadd.f32 0.0, %v752
          %754 = vmatmul.bf16.gmra.mxu0 %v559
          %v755 = vpop.f32.mrf.mxu0
          %v756 = vadd.f32 0.0, %v755
          %v757 = vpop.f32.mrf.mxu0
          %v758 = vadd.f32 0.0, %v757
          %759 = vmatmul.bf16.gmra.mxu0 %v561
          %v760 = vpop.f32.mrf.mxu0
          %v761 = vadd.f32 0.0, %v760
          %v762 = vpop.f32.mrf.mxu0
          %v763 = vadd.f32 0.0, %v762
          %764 = vmatmul.bf16.gmra.mxu0 %v563
          %v765 = vpop.f32.mrf.mxu0
          %v766 = vadd.f32 0.0, %v765
          %v767 = vpop.f32.mrf.mxu0
          %v768 = vadd.f32 0.0, %v767
          %769 = vmatmul.bf16.gmra.mxu0 %v565
          %v770 = vpop.f32.mrf.mxu0
          %v771 = vadd.f32 0.0, %v770
          %v772 = vpop.f32.mrf.mxu0
          %v773 = vadd.f32 0.0, %v772
          %774 = vmatmul.bf16.gmra.mxu0 %v567
          %v775 = vpop.f32.mrf.mxu0
          %v776 = vadd.f32 0.0, %v775
          %v777 = vpop.f32.mrf.mxu0
          %v778 = vadd.f32 0.0, %v777
          %779 = vmatmul.bf16.gmra.mxu0 %v569
          %v780 = vpop.f32.mrf.mxu0
          %v781 = vadd.f32 0.0, %v780
          %v782 = vpop.f32.mrf.mxu0
          %v783 = vadd.f32 0.0, %v782
          %784 = vmatmul.bf16.gmra.mxu0 %v571
          %v785 = vpop.f32.mrf.mxu0
          %v786 = vadd.f32 0.0, %v785
          %v787 = vpop.f32.mrf.mxu0
          %v788 = vadd.f32 0.0, %v787
          %789 = vdwg.mxu0
          %790 = vmatpush.bf16.msra.mxu0 %v684
          %791 = vmatpush.bf16.msra.mxu0 %v683
          %792 = vmatpush.bf16.msra.mxu0 %v682
          %793 = vmatpush.bf16.msra.mxu0 %v681
          %794 = vmatpush.bf16.msra.mxu0 %v680
          %795 = vmatpush.bf16.msra.mxu0 %v679
          %796 = vmatpush.bf16.msra.mxu0 %v678
          %797 = vmatpush.bf16.msra.mxu0 %v677
          %798 = vmatmul.bf16.gmra.mxu0 %v542
          %v799 = vpop.f32.mrf.mxu0
          %v800 = vadd.f32 %v711, %v799
          %v801 = vpop.f32.mrf.mxu0
          %v802 = vadd.f32 %v713, %v801
          %803 = vmatmul.bf16.gmra.mxu0 %v544
          %v804 = vpop.f32.mrf.mxu0
          %v805 = vadd.f32 %v716, %v804
          %v806 = vpop.f32.mrf.mxu0
          %v807 = vadd.f32 %v718, %v806
          %808 = vmatmul.bf16.gmra.mxu0 %v546
          %v809 = vpop.f32.mrf.mxu0
          %v810 = vadd.f32 %v721, %v809
          %v811 = vpop.f32.mrf.mxu0
          %v812 = vadd.f32 %v723, %v811
          %813 = vmatmul.bf16.gmra.mxu0 %v548
          %v814 = vpop.f32.mrf.mxu0
          %v815 = vadd.f32 %v726, %v814
          %v816 = vpop.f32.mrf.mxu0
          %v817 = vadd.f32 %v728, %v816
          %818 = vmatmul.bf16.gmra.mxu0 %v550
          %v819 = vpop.f32.mrf.mxu0
          %v820 = vadd.f32 %v731, %v819
          %v821 = vpop.f32.mrf.mxu0
          %v822 = vadd.f32 %v733, %v821
          %823 = vmatmul.bf16.gmra.mxu0 %v552
          %v824 = vpop.f32.mrf.mxu0
          %v825 = vadd.f32 %v736, %v824
          %v826 = vpop.f32.mrf.mxu0
          %v827 = vadd.f32 %v738, %v826
          %828 = vmatmul.bf16.gmra.mxu0 %v554
          %v829 = vpop.f32.mrf.mxu0
          %v830 = vadd.f32 %v741, %v829
          %v831 = vpop.f32.mrf.mxu0
          %v832 = vadd.f32 %v743, %v831
          %833 = vmatmul.bf16.gmra.mxu0 %v556
          %v834 = vpop.f32.mrf.mxu0
          %v835 = vadd.f32 %v746, %v834
          %v836 = vpop.f32.mrf.mxu0
          %v837 = vadd.f32 %v748, %v836
          %838 = vmatmul.bf16.gmra.mxu0 %v558
          %v839 = vpop.f32.mrf.mxu0
          %v840 = vadd.f32 %v751, %v839
          %v841 = vpop.f32.mrf.mxu0
          %v842 = vadd.f32 %v753, %v841
          %843 = vmatmul.bf16.gmra.mxu0 %v560
          %v844 = vpop.f32.mrf.mxu0
          %v845 = vadd.f32 %v756, %v844
          %v846 = vpop.f32.mrf.mxu0
          %v847 = vadd.f32 %v758, %v846
          %848 = vmatmul.bf16.gmra.mxu0 %v562
          %v849 = vpop.f32.mrf.mxu0
          %v850 = vadd.f32 %v761, %v849
          %v851 = vpop.f32.mrf.mxu0
          %v852 = vadd.f32 %v763, %v851
          %853 = vmatmul.bf16.gmra.mxu0 %v564
          %v854 = vpop.f32.mrf.mxu0
          %v855 = vadd.f32 %v766, %v854
          %v856 = vpop.f32.mrf.mxu0
          %v857 = vadd.f32 %v768, %v856
          %858 = vmatmul.bf16.gmra.mxu0 %v566
          %v859 = vpop.f32.mrf.mxu0
          %v860 = vadd.f32 %v771, %v859
          %v861 = vpop.f32.mrf.mxu0
          %v862 = vadd.f32 %v773, %v861
          %863 = vmatmul.bf16.gmra.mxu0 %v568
          %v864 = vpop.f32.mrf.mxu0
          %v865 = vadd.f32 %v776, %v864
          %v866 = vpop.f32.mrf.mxu0
          %v867 = vadd.f32 %v778, %v866
          %868 = vmatmul.bf16.gmra.mxu0 %v570
          %v869 = vpop.f32.mrf.mxu0
          %v870 = vadd.f32 %v781, %v869
          %v871 = vpop.f32.mrf.mxu0
          %v872 = vadd.f32 %v783, %v871
          %873 = vmatmul.bf16.gmra.mxu0 %v572
          %v874 = vpop.f32.mrf.mxu0
          %v875 = vadd.f32 %v786, %v874
          %v876 = vpop.f32.mrf.mxu0
          %v877 = vadd.f32 %v788, %v876
          %878 = vdwg.mxu0
          %v879 = vadd.f32 %v345, %v800
          %v880 = vadd.f32 %v346, %v802
          %v881 = vadd.f32 %v347, %v805
          %v882 = vadd.f32 %v348, %v807
          %v883 = vadd.f32 %v349, %v810
          %v884 = vadd.f32 %v350, %v812
          %v885 = vadd.f32 %v351, %v815
          %v886 = vadd.f32 %v352, %v817
          %v887 = vadd.f32 %v353, %v820
          %v888 = vadd.f32 %v354, %v822
          %v889 = vadd.f32 %v355, %v825
          %v890 = vadd.f32 %v356, %v827
          %v891 = vadd.f32 %v357, %v830
          %v892 = vadd.f32 %v358, %v832
          %v893 = vadd.f32 %v359, %v835
          %v894 = vadd.f32 %v360, %v837
          %v895 = vadd.f32 %v361, %v840
          %v896 = vadd.f32 %v362, %v842
          %v897 = vadd.f32 %v363, %v845
          %v898 = vadd.f32 %v364, %v847
          %v899 = vadd.f32 %v365, %v850
          %v900 = vadd.f32 %v366, %v852
          %v901 = vadd.f32 %v367, %v855
          %v902 = vadd.f32 %v368, %v857
          %v903 = vadd.f32 %v369, %v860
          %v904 = vadd.f32 %v370, %v862
          %v905 = vadd.f32 %v371, %v865
          %v906 = vadd.f32 %v372, %v867
          %v907 = vadd.f32 %v373, %v870
          %v908 = vadd.f32 %v374, %v872
          %v909 = vadd.f32 %v375, %v875
          %v910 = vadd.f32 %v376, %v877
          %vm911 = vcmask 523264
          %912 = vst.msk [vmem:[#allocation2] sm:$0xff] %vm911, %v879
          %913 = vst.msk [vmem:[#allocation2 + $0x8] sm:$0xff] %vm911, %v880
          %914 = vst.msk [vmem:[#allocation2 + $0x10] sm:$0xff] %vm911, %v881
          %915 = vst.msk [vmem:[#allocation2 + $0x18] sm:$0xff] %vm911, %v882
          %916 = vst.msk [vmem:[#allocation2 + $0x20] sm:$0xff] %vm911, %v883
          %917 = vst.msk [vmem:[#allocation2 + $0x28] sm:$0xff] %vm911, %v884
          %918 = vst.msk [vmem:[#allocation2 + $0x30] sm:$0xff] %vm911, %v885
          %919 = vst.msk [vmem:[#allocation2 + $0x38] sm:$0xff] %vm911, %v886
          %920 = vst.msk [vmem:[#allocation2 + $0x40] sm:$0xff] %vm911, %v887
          %921 = vst.msk [vmem:[#allocation2 + $0x48] sm:$0xff] %vm911, %v888
          %922 = vst.msk [vmem:[#allocation2 + $0x50] sm:$0xff] %vm911, %v889
          %923 = vst.msk [vmem:[#allocation2 + $0x58] sm:$0xff] %vm911, %v890
          %924 = vst.msk [vmem:[#allocation2 + $0x60] sm:$0xff] %vm911, %v891
          %925 = vst.msk [vmem:[#allocation2 + $0x68] sm:$0xff] %vm911, %v892
          %926 = vst.msk [vmem:[#allocation2 + $0x70] sm:$0xff] %vm911, %v893
          %927 = vst.msk [vmem:[#allocation2 + $0x78] sm:$0xff] %vm911, %v894
          %928 = vst.msk [vmem:[#allocation2 + $0x80] sm:$0xff] %vm911, %v895
          %929 = vst.msk [vmem:[#allocation2 + $0x88] sm:$0xff] %vm911, %v896
          %930 = vst.msk [vmem:[#allocation2 + $0x90] sm:$0xff] %vm911, %v897
          %931 = vst.msk [vmem:[#allocation2 + $0x98] sm:$0xff] %vm911, %v898
          %932 = vst.msk [vmem:[#allocation2 + $0xa0] sm:$0xff] %vm911, %v899
          %933 = vst.msk [vmem:[#allocation2 + $0xa8] sm:$0xff] %vm911, %v900
          %934 = vst.msk [vmem:[#allocation2 + $0xb0] sm:$0xff] %vm911, %v901
          %935 = vst.msk [vmem:[#allocation2 + $0xb8] sm:$0xff] %vm911, %v902
          %936 = vst.msk [vmem:[#allocation2 + $0xc0] sm:$0xff] %vm911, %v903
          %937 = vst.msk [vmem:[#allocation2 + $0xc8] sm:$0xff] %vm911, %v904
          %938 = vst.msk [vmem:[#allocation2 + $0xd0] sm:$0xff] %vm911, %v905
          %939 = vst.msk [vmem:[#allocation2 + $0xd8] sm:$0xff] %vm911, %v906
          %940 = vst.msk [vmem:[#allocation2 + $0xe0] sm:$0xff] %vm911, %v907
          %941 = vst.msk [vmem:[#allocation2 + $0xe8] sm:$0xff] %vm911, %v908
          %942 = vst.msk [vmem:[#allocation2 + $0xf0] sm:$0xff] %vm911, %v909
          %943 = vst.msk [vmem:[#allocation2 + $0xf8] sm:$0xff] %vm911, %v910
        $region56: #{tpu_custom_call.1} parent=35 // pred_fallthru
          _
        %p944 = scmp.eq.s32.totalorder %s39, 2
        // Predicated region
        $region57: #{tpu_custom_call.1} parent=35 // pred_check
          %p945 = pneg %p944
        $region58: #{tpu_custom_call.1} parent=35 // pred_check_branch
          %947 = sbr.rel (%p945) target = $region60
        $region59: #{tpu_custom_call.1} parent=35 // pred_region
          %v948 = vld [vmem:[#allocation2] sm:$0xff]
          %v949 = vld [vmem:[#allocation2 + $0x8] sm:$0xff]
          %v950 = vld [vmem:[#allocation2 + $0x10] sm:$0xff]
          %v951 = vld [vmem:[#allocation2 + $0x18] sm:$0xff]
          %v952 = vld [vmem:[#allocation2 + $0x20] sm:$0xff]
          %v953 = vld [vmem:[#allocation2 + $0x28] sm:$0xff]
          %v954 = vld [vmem:[#allocation2 + $0x30] sm:$0xff]
          %v955 = vld [vmem:[#allocation2 + $0x38] sm:$0xff]
          %v956 = vld [vmem:[#allocation2 + $0x40] sm:$0xff]
          %v957 = vld [vmem:[#allocation2 + $0x48] sm:$0xff]
          %v958 = vld [vmem:[#allocation2 + $0x50] sm:$0xff]
          %v959 = vld [vmem:[#allocation2 + $0x58] sm:$0xff]
          %v960 = vld [vmem:[#allocation2 + $0x60] sm:$0xff]
          %v961 = vld [vmem:[#allocation2 + $0x68] sm:$0xff]
          %v962 = vld [vmem:[#allocation2 + $0x70] sm:$0xff]
          %v963 = vld [vmem:[#allocation2 + $0x78] sm:$0xff]
          %v964 = vld [vmem:[#allocation2 + $0x80] sm:$0xff]
          %v965 = vld [vmem:[#allocation2 + $0x88] sm:$0xff]
          %v966 = vld [vmem:[#allocation2 + $0x90] sm:$0xff]
          %v967 = vld [vmem:[#allocation2 + $0x98] sm:$0xff]
          %v968 = vld [vmem:[#allocation2 + $0xa0] sm:$0xff]
          %v969 = vld [vmem:[#allocation2 + $0xa8] sm:$0xff]
          %v970 = vld [vmem:[#allocation2 + $0xb0] sm:$0xff]
          %v971 = vld [vmem:[#allocation2 + $0xb8] sm:$0xff]
          %v972 = vld [vmem:[#allocation2 + $0xc0] sm:$0xff]
          %v973 = vld [vmem:[#allocation2 + $0xc8] sm:$0xff]
          %v974 = vld [vmem:[#allocation2 + $0xd0] sm:$0xff]
          %v975 = vld [vmem:[#allocation2 + $0xd8] sm:$0xff]
          %v976 = vld [vmem:[#allocation2 + $0xe0] sm:$0xff]
          %v977 = vld [vmem:[#allocation2 + $0xe8] sm:$0xff]
          %v978 = vld [vmem:[#allocation2 + $0xf0] sm:$0xff]
          %v979 = vld [vmem:[#allocation2 + $0xf8] sm:$0xff]
          %v980 = vld [vmem:[#allocation10] sm:$0x1]
          %v982 = vperm.slane %v980, 0
          %v984 = vadd.f32 %v948, %v982
          %v985 = vadd.f32 %v949, %v982
          %v986 = vadd.f32 %v950, %v982
          %v987 = vadd.f32 %v951, %v982
          %v988 = vadd.f32 %v952, %v982
          %v989 = vadd.f32 %v953, %v982
          %v990 = vadd.f32 %v954, %v982
          %v991 = vadd.f32 %v955, %v982
          %v992 = vadd.f32 %v956, %v982
          %v993 = vadd.f32 %v957, %v982
          %v994 = vadd.f32 %v958, %v982
          %v995 = vadd.f32 %v959, %v982
          %v996 = vadd.f32 %v960, %v982
          %v997 = vadd.f32 %v961, %v982
          %v998 = vadd.f32 %v962, %v982
          %v999 = vadd.f32 %v963, %v982
          %v1000 = vadd.f32 %v964, %v982
          %v1001 = vadd.f32 %v965, %v982
          %v1002 = vadd.f32 %v966, %v982
          %v1003 = vadd.f32 %v967, %v982
          %v1004 = vadd.f32 %v968, %v982
          %v1005 = vadd.f32 %v969, %v982
          %v1006 = vadd.f32 %v970, %v982
          %v1007 = vadd.f32 %v971, %v982
          %v1008 = vadd.f32 %v972, %v982
          %v1009 = vadd.f32 %v973, %v982
          %v1010 = vadd.f32 %v974, %v982
          %v1011 = vadd.f32 %v975, %v982
          %v1012 = vadd.f32 %v976, %v982
          %v1013 = vadd.f32 %v977, %v982
          %v1014 = vadd.f32 %v978, %v982
          %v1015 = vadd.f32 %v979, %v982
          %v1016 = vmax.f32 %v984, 0.0
          %v1017 = vmax.f32 %v985, 0.0
          %v1018 = vmax.f32 %v986, 0.0
          %v1019 = vmax.f32 %v987, 0.0
          %v1020 = vmax.f32 %v988, 0.0
          %v1021 = vmax.f32 %v989, 0.0
          %v1022 = vmax.f32 %v990, 0.0
          %v1023 = vmax.f32 %v991, 0.0
          %v1024 = vmax.f32 %v992, 0.0
          %v1025 = vmax.f32 %v993, 0.0
          %v1026 = vmax.f32 %v994, 0.0
          %v1027 = vmax.f32 %v995, 0.0
          %v1028 = vmax.f32 %v996, 0.0
          %v1029 = vmax.f32 %v997, 0.0
          %v1030 = vmax.f32 %v998, 0.0
          %v1031 = vmax.f32 %v999, 0.0
          %v1032 = vmax.f32 %v1000, 0.0
          %v1033 = vmax.f32 %v1001, 0.0
          %v1034 = vmax.f32 %v1002, 0.0
          %v1035 = vmax.f32 %v1003, 0.0
          %v1036 = vmax.f32 %v1004, 0.0
          %v1037 = vmax.f32 %v1005, 0.0
          %v1038 = vmax.f32 %v1006, 0.0
          %v1039 = vmax.f32 %v1007, 0.0
          %v1040 = vmax.f32 %v1008, 0.0
          %v1041 = vmax.f32 %v1009, 0.0
          %v1042 = vmax.f32 %v1010, 0.0
          %v1043 = vmax.f32 %v1011, 0.0
          %v1044 = vmax.f32 %v1012, 0.0
          %v1045 = vmax.f32 %v1013, 0.0
          %v1046 = vmax.f32 %v1014, 0.0
          %v1047 = vmax.f32 %v1015, 0.0
          %v1048 = vpack.c.bf16 %v1017, %v1016
          %v1049 = vpack.c.bf16 %v1019, %v1018
          %v1050 = vpack.c.bf16 %v1021, %v1020
          %v1051 = vpack.c.bf16 %v1023, %v1022
          %v1052 = vpack.c.bf16 %v1025, %v1024
          %v1053 = vpack.c.bf16 %v1027, %v1026
          %v1054 = vpack.c.bf16 %v1029, %v1028
          %v1055 = vpack.c.bf16 %v1031, %v1030
          %v1056 = vpack.c.bf16 %v1033, %v1032
          %v1057 = vpack.c.bf16 %v1035, %v1034
          %v1058 = vpack.c.bf16 %v1037, %v1036
          %v1059 = vpack.c.bf16 %v1039, %v1038
          %v1060 = vpack.c.bf16 %v1041, %v1040
          %v1061 = vpack.c.bf16 %v1043, %v1042
          %v1062 = vpack.c.bf16 %v1045, %v1044
          %v1063 = vpack.c.bf16 %v1047, %v1046
          %v1064 = vld [vmem:[#allocation8] sm:$0xf]
          %v1065 = vld [vmem:[#allocation8 + $0x4] sm:$0xf]
          %v1066 = vld [vmem:[#allocation8 + $0x8] sm:$0xf]
          %v1067 = vld [vmem:[#allocation8 + $0xc] sm:$0xf]
          %v1068 = vld [vmem:[#allocation8 + $0x10] sm:$0xf]
          %v1069 = vld [vmem:[#allocation8 + $0x14] sm:$0xf]
          %v1070 = vld [vmem:[#allocation8 + $0x18] sm:$0xf]
          %v1071 = vld [vmem:[#allocation8 + $0x1c] sm:$0xf]
          %v1080 = vunpack.c.l.b16 %v1064
          %v1081 = vunpack.c.l.b16 %v1065
          %v1082 = vunpack.c.l.b16 %v1066
          %v1083 = vunpack.c.l.b16 %v1067
          %v1084 = vunpack.c.l.b16 %v1068
          %v1085 = vunpack.c.l.b16 %v1069
          %v1086 = vunpack.c.l.b16 %v1070
          %v1087 = vunpack.c.l.b16 %v1071
          %v1088 = vpack.c.b16 %v1081, %v1080
          %v1089 = vpack.c.b16 %v1083, %v1082
          %v1090 = vpack.c.b16 %v1085, %v1084
          %v1091 = vpack.c.b16 %v1087, %v1086
          %vm1096 = vcmask 523264
          %v1098 = vsel %vm1096, %v1048, 0
          %v1101 = vsel %vm1096, %v1049, 0
          %v1104 = vsel %vm1096, %v1050, 0
          %v1107 = vsel %vm1096, %v1051, 0
          %v1110 = vsel %vm1096, %v1052, 0
          %v1113 = vsel %vm1096, %v1053, 0
          %v1116 = vsel %vm1096, %v1054, 0
          %v1119 = vsel %vm1096, %v1055, 0
          %v1122 = vsel %vm1096, %v1056, 0
          %v1125 = vsel %vm1096, %v1057, 0
          %v1128 = vsel %vm1096, %v1058, 0
          %v1131 = vsel %vm1096, %v1059, 0
          %v1134 = vsel %vm1096, %v1060, 0
          %v1137 = vsel %vm1096, %v1061, 0
          %v1140 = vsel %vm1096, %v1062, 0
          %v1143 = vsel %vm1096, %v1063, 0
          %1145 = vmatpush.bf16.msra.mxu0 0
          %1146 = vmatpush.bf16.msra.mxu0 0
          %1147 = vmatpush.bf16.msra.mxu0 0
          %1148 = vmatpush.bf16.msra.mxu0 0
          %1149 = vmatpush.bf16.msra.mxu0 %v1091
          %1150 = vmatpush.bf16.msra.mxu0 %v1090
          %1151 = vmatpush.bf16.msra.mxu0 %v1089
          %1152 = vmatpush.bf16.msra.mxu0 %v1088
          %1153 = vmatmul.bf16.gmra.mxu0 %v1098
          %v1154 = vpop.f32.mrf.mxu0
          %v1155 = vadd.f32 0.0, %v1154
          %v1156 = vpop.f32.mrf.mxu0
          %v1157 = vadd.f32 0.0, %v1156
          %1158 = vmatmul.bf16.gmra.mxu0 %v1101
          %v1159 = vpop.f32.mrf.mxu0
          %v1160 = vadd.f32 0.0, %v1159
          %v1161 = vpop.f32.mrf.mxu0
          %v1162 = vadd.f32 0.0, %v1161
          %1163 = vmatmul.bf16.gmra.mxu0 %v1104
          %v1164 = vpop.f32.mrf.mxu0
          %v1165 = vadd.f32 0.0, %v1164
          %v1166 = vpop.f32.mrf.mxu0
          %v1167 = vadd.f32 0.0, %v1166
          %1168 = vmatmul.bf16.gmra.mxu0 %v1107
          %v1169 = vpop.f32.mrf.mxu0
          %v1170 = vadd.f32 0.0, %v1169
          %v1171 = vpop.f32.mrf.mxu0
          %v1172 = vadd.f32 0.0, %v1171
          %1173 = vmatmul.bf16.gmra.mxu0 %v1110
          %v1174 = vpop.f32.mrf.mxu0
          %v1175 = vadd.f32 0.0, %v1174
          %v1176 = vpop.f32.mrf.mxu0
          %v1177 = vadd.f32 0.0, %v1176
          %1178 = vmatmul.bf16.gmra.mxu0 %v1113
          %v1179 = vpop.f32.mrf.mxu0
          %v1180 = vadd.f32 0.0, %v1179
          %v1181 = vpop.f32.mrf.mxu0
          %v1182 = vadd.f32 0.0, %v1181
          %1183 = vmatmul.bf16.gmra.mxu0 %v1116
          %v1184 = vpop.f32.mrf.mxu0
          %v1185 = vadd.f32 0.0, %v1184
          %v1186 = vpop.f32.mrf.mxu0
          %v1187 = vadd.f32 0.0, %v1186
          %1188 = vmatmul.bf16.gmra.mxu0 %v1119
          %v1189 = vpop.f32.mrf.mxu0
          %v1190 = vadd.f32 0.0, %v1189
          %v1191 = vpop.f32.mrf.mxu0
          %v1192 = vadd.f32 0.0, %v1191
          %1193 = vmatmul.bf16.gmra.mxu0 %v1122
          %v1194 = vpop.f32.mrf.mxu0
          %v1195 = vadd.f32 0.0, %v1194
          %v1196 = vpop.f32.mrf.mxu0
          %v1197 = vadd.f32 0.0, %v1196
          %1198 = vmatmul.bf16.gmra.mxu0 %v1125
          %v1199 = vpop.f32.mrf.mxu0
          %v1200 = vadd.f32 0.0, %v1199
          %v1201 = vpop.f32.mrf.mxu0
          %v1202 = vadd.f32 0.0, %v1201
          %1203 = vmatmul.bf16.gmra.mxu0 %v1128
          %v1204 = vpop.f32.mrf.mxu0
          %v1205 = vadd.f32 0.0, %v1204
          %v1206 = vpop.f32.mrf.mxu0
          %v1207 = vadd.f32 0.0, %v1206
          %1208 = vmatmul.bf16.gmra.mxu0 %v1131
          %v1209 = vpop.f32.mrf.mxu0
          %v1210 = vadd.f32 0.0, %v1209
          %v1211 = vpop.f32.mrf.mxu0
          %v1212 = vadd.f32 0.0, %v1211
          %1213 = vmatmul.bf16.gmra.mxu0 %v1134
          %v1214 = vpop.f32.mrf.mxu0
          %v1215 = vadd.f32 0.0, %v1214
          %v1216 = vpop.f32.mrf.mxu0
          %v1217 = vadd.f32 0.0, %v1216
          %1218 = vmatmul.bf16.gmra.mxu0 %v1137
          %v1219 = vpop.f32.mrf.mxu0
          %v1220 = vadd.f32 0.0, %v1219
          %v1221 = vpop.f32.mrf.mxu0
          %v1222 = vadd.f32 0.0, %v1221
          %1223 = vmatmul.bf16.gmra.mxu0 %v1140
          %v1224 = vpop.f32.mrf.mxu0
          %v1225 = vadd.f32 0.0, %v1224
          %v1226 = vpop.f32.mrf.mxu0
          %v1227 = vadd.f32 0.0, %v1226
          %1228 = vmatmul.bf16.gmra.mxu0 %v1143
          %v1229 = vpop.f32.mrf.mxu0
          %v1230 = vadd.f32 0.0, %v1229
          %v1231 = vpop.f32.mrf.mxu0
          %v1232 = vadd.f32 0.0, %v1231
          %1233 = vdwg.mxu0
          %v1234 = vpack.c.bf16 %v1155, %v1155
          %v1235 = vpack.c.bf16 %v1157, %v1157
          %v1236 = vpack.c.bf16 %v1160, %v1160
          %v1237 = vpack.c.bf16 %v1162, %v1162
          %v1238 = vpack.c.bf16 %v1165, %v1165
          %v1239 = vpack.c.bf16 %v1167, %v1167
          %v1240 = vpack.c.bf16 %v1170, %v1170
          %v1241 = vpack.c.bf16 %v1172, %v1172
          %v1242 = vpack.c.bf16 %v1175, %v1175
          %v1243 = vpack.c.bf16 %v1177, %v1177
          %v1244 = vpack.c.bf16 %v1180, %v1180
          %v1245 = vpack.c.bf16 %v1182, %v1182
          %v1246 = vpack.c.bf16 %v1185, %v1185
          %v1247 = vpack.c.bf16 %v1187, %v1187
          %v1248 = vpack.c.bf16 %v1190, %v1190
          %v1249 = vpack.c.bf16 %v1192, %v1192
          %v1250 = vpack.c.bf16 %v1195, %v1195
          %v1251 = vpack.c.bf16 %v1197, %v1197
          %v1252 = vpack.c.bf16 %v1200, %v1200
          %v1253 = vpack.c.bf16 %v1202, %v1202
          %v1254 = vpack.c.bf16 %v1205, %v1205
          %v1255 = vpack.c.bf16 %v1207, %v1207
          %v1256 = vpack.c.bf16 %v1210, %v1210
          %v1257 = vpack.c.bf16 %v1212, %v1212
          %v1258 = vpack.c.bf16 %v1215, %v1215
          %v1259 = vpack.c.bf16 %v1217, %v1217
          %v1260 = vpack.c.bf16 %v1220, %v1220
          %v1261 = vpack.c.bf16 %v1222, %v1222
          %v1262 = vpack.c.bf16 %v1225, %v1225
          %v1263 = vpack.c.bf16 %v1227, %v1227
          %v1264 = vpack.c.bf16 %v1230, %v1230
          %v1265 = vpack.c.bf16 %v1232, %v1232
          %vm1266 = vcmask 519168
          %1267 = vst.msk [vmem:[%s296] sm:$0xf] %vm1266, %v1234
          %1268 = vst.msk [vmem:[%s296 + $0x4] sm:$0xf] %vm1266, %v1235
          %1269 = vst.msk [vmem:[%s296 + $0x8] sm:$0xf] %vm1266, %v1236
          %1270 = vst.msk [vmem:[%s296 + $0xc] sm:$0xf] %vm1266, %v1237
          %1271 = vst.msk [vmem:[%s296 + $0x10] sm:$0xf] %vm1266, %v1238
          %1272 = vst.msk [vmem:[%s296 + $0x14] sm:$0xf] %vm1266, %v1239
          %1273 = vst.msk [vmem:[%s296 + $0x18] sm:$0xf] %vm1266, %v1240
          %1274 = vst.msk [vmem:[%s296 + $0x1c] sm:$0xf] %vm1266, %v1241
          %1275 = vst.msk [vmem:[%s296 + $0x20] sm:$0xf] %vm1266, %v1242
          %1276 = vst.msk [vmem:[%s296 + $0x24] sm:$0xf] %vm1266, %v1243
          %1277 = vst.msk [vmem:[%s296 + $0x28] sm:$0xf] %vm1266, %v1244
          %1278 = vst.msk [vmem:[%s296 + $0x2c] sm:$0xf] %vm1266, %v1245
          %1279 = vst.msk [vmem:[%s296 + $0x30] sm:$0xf] %vm1266, %v1246
          %1280 = vst.msk [vmem:[%s296 + $0x34] sm:$0xf] %vm1266, %v1247
          %1281 = vst.msk [vmem:[%s296 + $0x38] sm:$0xf] %vm1266, %v1248
          %1282 = vst.msk [vmem:[%s296 + $0x3c] sm:$0xf] %vm1266, %v1249
          %1283 = vst.msk [vmem:[%s296 + $0x40] sm:$0xf] %vm1266, %v1250
          %1284 = vst.msk [vmem:[%s296 + $0x44] sm:$0xf] %vm1266, %v1251
          %1285 = vst.msk [vmem:[%s296 + $0x48] sm:$0xf] %vm1266, %v1252
          %1286 = vst.msk [vmem:[%s296 + $0x4c] sm:$0xf] %vm1266, %v1253
          %1287 = vst.msk [vmem:[%s296 + $0x50] sm:$0xf] %vm1266, %v1254
          %1288 = vst.msk [vmem:[%s296 + $0x54] sm:$0xf] %vm1266, %v1255
          %1289 = vst.msk [vmem:[%s296 + $0x58] sm:$0xf] %vm1266, %v1256
          %1290 = vst.msk [vmem:[%s296 + $0x5c] sm:$0xf] %vm1266, %v1257
          %1291 = vst.msk [vmem:[%s296 + $0x60] sm:$0xf] %vm1266, %v1258
          %1292 = vst.msk [vmem:[%s296 + $0x64] sm:$0xf] %vm1266, %v1259
          %1293 = vst.msk [vmem:[%s296 + $0x68] sm:$0xf] %vm1266, %v1260
          %1294 = vst.msk [vmem:[%s296 + $0x6c] sm:$0xf] %vm1266, %v1261
          %1295 = vst.msk [vmem:[%s296 + $0x70] sm:$0xf] %vm1266, %v1262
          %1296 = vst.msk [vmem:[%s296 + $0x74] sm:$0xf] %vm1266, %v1263
          %1297 = vst.msk [vmem:[%s296 + $0x78] sm:$0xf] %vm1266, %v1264
          %1298 = vst.msk [vmem:[%s296 + $0x7c] sm:$0xf] %vm1266, %v1265
        $region60: #{tpu_custom_call.1} parent=35 // pred_fallthru
          _
        %s1299 = smul.u32 32, %s38
        %p1300 = scmp.lt.s32.totalorder %s1299, 95
        %s1301 = scalar_select %p1300, %s1299, 95
        %s1302 = smul.addr %s1301, 4
        %s1303 = scalar_lea.vmem %s6, %s1302
        // Predicated region
        $region61: #{tpu_custom_call.1} parent=35 // pred_check
          %p1304 = pneg %p161
        $region62: #{tpu_custom_call.1} parent=35 // pred_check_branch
          %1306 = sbr.rel (%p1304) target = $region64
        $region63: #{tpu_custom_call.1} parent=35 // pred_region
          %s1307 = smul.u32 32, %s38
        $region64: #{tpu_custom_call.1} parent=35 // pred_fallthru
          _
      $region36: #{tpu_custom_call.1} parent=5 // pred_fallthru
        _
      %p1308 = scmp.le.s32.totalorder 2, %s29
      // Predicated region
      $region65: #{tpu_custom_call.1} parent=5 // pred_check
        %p1309 = pneg %p1308
      $region66: #{tpu_custom_call.1} parent=5 // pred_check_branch
        %1311 = sbr.rel (%p1309) target = $region68
      $region67: #{tpu_custom_call.1} parent=5 // pred_region
        %s1312 = ssub.s32 %s29, 2
        // Predicated region
        $region69: #{tpu_custom_call.1} parent=67 // pred_check
          %p1313 = pneg %p167
        $region70: #{tpu_custom_call.1} parent=67 // pred_check_branch
          %1315 = sbr.rel (%p1313) target = $region72
        $region71: #{tpu_custom_call.1} parent=67 // pred_region
          %s1316 = smul.u32 32, %s40
          %p1317 = scmp.lt.s32.totalorder %s1316, 95
          %s1318 = scalar_select %p1317, %s1316, 95
          %s1319 = smul.addr %s1318, 4
          %s1320 = scalar_lea.vmem %s6, %s1319
        $region72: #{tpu_custom_call.1} parent=67 // pred_fallthru
          _
      $region68: #{tpu_custom_call.1} parent=5 // pred_fallthru
        _
    $region6: #{tpu_custom_call.1} parent=1 // loop_footer
      %s33 = sadd.s32 1, %s29
    $region7: #{tpu_custom_call.1} parent=1 // loop_footer_branch
      %28 = sbr.rel target = $region3
    $region8: #{tpu_custom_call.1} parent=1 // loop_exit
      _
    %1321 = vsyncpa [#allocation7], 1
    %s1322 = scalar_lea.sflag [#allocation7], 1
    %1323 = vsyncpa %s1322, 1
    %1324 = vsyncpa [#allocation9], 1

</llo_original>
